<compile_context>
chip_gen: v7x
topology: tpu7x:2x2x1
jax: 0.10.0
libtpu: 0.0.40
codegen_flags: <defaults>
</compile_context>

<pallas_src>
import functools

import jax
import jax.numpy as jnp
from jax.experimental import pallas as pl
from jax.experimental.pallas import tpu as pltpu


def _silu_f32(z):
    # exp + logistic go to the EUP slot; VALU only does the final multiply.
    return z * jax.nn.sigmoid(z)


def mlp_kernel(x_ref, w1_ref, wmid_ref, wout_ref, bmid_ref, bout_ref, o_ref):
    """7-layer MLP: 6x (Linear + SiLU) then a final Linear.

    x_ref    : (bm, Fp)        f32   activation tile (pipelined over the grid)
    w1_ref   : (Fp, Hp)        bf16  layer-1 weight      (VMEM-resident)
    wmid_ref : (5, Hp, Hp)     bf16  layers 2..6 weights (VMEM-resident)
    wout_ref : (Hp, Op)        bf16  layer-7 weight      (VMEM-resident)
    bmid_ref : (6, 1, Hp)      f32   biases of layers 1..6
    bout_ref : (1, Op)         f32   bias of layer 7
    o_ref    : (bm, Op)        f32   output tile
    """
    cdt = jnp.bfloat16

    # layer 1
    h = jnp.dot(x_ref[...].astype(cdt), w1_ref[...],
                preferred_element_type=jnp.float32)
    h = _silu_f32(h + bmid_ref[0])

    # layers 2..6 (static Python unroll; trip count is tiny and fixed)
    for i in range(5):
        h = jnp.dot(h.astype(cdt), wmid_ref[i],
                    preferred_element_type=jnp.float32)
        h = _silu_f32(h + bmid_ref[i + 1])

    # layer 7 (no activation)
    out = jnp.dot(h.astype(cdt), wout_ref[...],
                  preferred_element_type=jnp.float32)
    o_ref[...] = (out + bout_ref[...]).astype(o_ref.dtype)


def _round_up(n, m):
    return ((n + m - 1) // m) * m


@functools.partial(jax.jit, static_argnames=("block_m",))
def mlp_forward(x, weights, biases, *, block_m=512):
    """x: [B, in_features] f32; weights[i]: [fan_in, fan_out] f32; biases[i]: [fan_out]."""
    batch, in_features = x.shape
    hidden = weights[0].shape[1]
    out_features = weights[6].shape[1]

    # Lane-dense padded dims (multiples of 128) and sublane-friendly batch tile.
    fp = _round_up(in_features, 128)
    hp = _round_up(hidden, 128)
    op = _round_up(out_features, 128)
    bm = min(block_m, _round_up(batch, 8))
    mp = _round_up(batch, bm)

    # --- pack / pad parameters (zero padding keeps the math exact) ---------
    x_p = jnp.zeros((mp, fp), jnp.float32).at[:batch, :in_features].set(x)

    def pad_w(w, rp, cp):
        return jnp.zeros((rp, cp), jnp.float32).at[:w.shape[0], :w.shape[1]].set(w)

    def pad_b(b, cp):
        return jnp.zeros((1, cp), jnp.float32).at[:, :b.shape[-1]].set(b.reshape(1, -1))

    w1 = pad_w(weights[0], fp, hp).astype(jnp.bfloat16)                       # (Fp, Hp)
    w_mid = jnp.stack([pad_w(weights[i], hp, hp) for i in range(1, 6)]
                      ).astype(jnp.bfloat16)                                  # (5, Hp, Hp)
    w_out = pad_w(weights[6], hp, op).astype(jnp.bfloat16)                    # (Hp, Op)
    b_mid = jnp.stack([pad_b(biases[i], hp) for i in range(6)])               # (6, 1, Hp)
    b_out = pad_b(biases[6], op)                                              # (1, Op)

    grid = (mp // bm,)

    flops = 2 * mp * (fp * hp + 5 * hp * hp + hp * op)
    transcendentals = 6 * mp * hp
    bytes_accessed = (x_p.size * 4 + w1.size * 2 + w_mid.size * 2 + w_out.size * 2
                      + b_mid.size * 4 + b_out.size * 4 + mp * op * 4)

    out_p = pl.pallas_call(
        mlp_kernel,
        out_shape=jax.ShapeDtypeStruct((mp, op), jnp.float32),
        grid_spec=pltpu.PrefetchScalarGridSpec(
            num_scalar_prefetch=0,
            grid=grid,
            in_specs=[
                # activation tile: pipelined over the batch grid
                pl.BlockSpec((bm, fp), lambda i: (i, 0)),
                # parameters: full-extent blocks -> stay VMEM-resident
                pl.BlockSpec((fp, hp), lambda i: (0, 0)),
                pl.BlockSpec((5, hp, hp), lambda i: (0, 0, 0)),
                pl.BlockSpec((hp, op), lambda i: (0, 0)),
                pl.BlockSpec((6, 1, hp), lambda i: (0, 0, 0)),
                pl.BlockSpec((1, op), lambda i: (0, 0)),
            ],
            out_specs=pl.BlockSpec((bm, op), lambda i: (i, 0)),
        ),
        compiler_params=pltpu.CompilerParams(
            # batch tiles are independent -> megacore sharding on v7x
            dimension_semantics=("parallel",),
        ),
        cost_estimate=pl.CostEstimate(
            flops=flops,
            transcendentals=transcendentals,
            bytes_accessed=bytes_accessed,
        ),
    )(x_p, w1, w_mid, w_out, b_mid, b_out)

    # slice the lane/batch padding away outside the kernel
    return out_p[:batch, :out_features]


def init_params(key, in_features, hidden_dim, out_features):
    """PyTorch-style nn.Linear init (uniform +/- 1/sqrt(fan_in)), deterministic."""
    dims = [in_features] + [hidden_dim] * 6 + [out_features]
    weights, biases = [], []
    for i in range(7):
        fan_in, fan_out = dims[i], dims[i + 1]
        key, kw, kb = jax.random.split(key, 3)
        bound = 1.0 / jnp.sqrt(jnp.float32(fan_in))
        # stored as [fan_in, fan_out] (i.e. PyTorch weight.T)
        w = jax.random.uniform(kw, (fan_in, fan_out), jnp.float32, -bound, bound)
        b = jax.random.uniform(kb, (fan_out,), jnp.float32, -bound, bound)
        weights.append(w)
        biases.append(b)
    return weights, biases


def reference_forward(x, weights, biases):
    """Mirrors the kernel's numerics: bf16 matmul inputs, f32 accumulate/SiLU."""
    h = x
    for i in range(6):
        z = jnp.dot(h.astype(jnp.bfloat16), weights[i].astype(jnp.bfloat16),
                    preferred_element_type=jnp.float32) + biases[i]
        h = z * jax.nn.sigmoid(z)
    return jnp.dot(h.astype(jnp.bfloat16), weights[6].astype(jnp.bfloat16),
                   preferred_element_type=jnp.float32) + biases[6]


if __name__ == "__main__":
    key = jax.random.PRNGKey(0)
    in_features, hidden_dim, out_features = 32, 64, 16
    batch = 256          # small, but >1 grid step with block_m=128
    block_m = 128

    kx, kp = jax.random.split(key)
    x = jax.random.normal(kx, (batch, in_features), jnp.float32)
    weights, biases = init_params(kp, in_features, hidden_dim, out_features)

    out = mlp_forward(x, weights, biases, block_m=block_m)
    jax.block_until_ready(out)

    ref = reference_forward(x, weights, biases)
    assert out.shape == (batch, out_features)
    assert jnp.allclose(out, ref, atol=1e-2, rtol=1e-2), (
        float(jnp.max(jnp.abs(out - ref))))

    print("KERNEL_OK")
</pallas_src>

<mosaic_0001>
module attributes {stable_mosaic.version = 11 : i64} {
  func.func @mlp_kernel(%arg0: i32, %arg1: memref<128x128xf32, #tpu.memory_space<vmem>>, %arg2: memref<128x128xbf16, #tpu.memory_space<vmem>>, %arg3: memref<5x128x128xbf16, #tpu.memory_space<vmem>>, %arg4: memref<128x128xbf16, #tpu.memory_space<vmem>>, %arg5: memref<6x1x128xf32, #tpu.memory_space<vmem>>, %arg6: memref<1x128xf32, #tpu.memory_space<vmem>>, %arg7: memref<128x128xf32, #tpu.memory_space<vmem>>) attributes {dimension_semantics = [#tpu.dimension_semantics<parallel>], iteration_bounds = array<i64: 2>, scalar_prefetch = 0 : i64, scratch_operands = 0 : i64, tpu.core_type = #tpu.core_type<tc>, window_params = [{transform_indices = @transform_0, window_bounds = array<i64: 128, 128>}, {pipeline_mode = #tpu.pipeline_mode<synchronous>, transform_indices = @transform_1, window_bounds = array<i64: 128, 128>}, {pipeline_mode = #tpu.pipeline_mode<synchronous>, transform_indices = @transform_2, window_bounds = array<i64: 5, 128, 128>}, {pipeline_mode = #tpu.pipeline_mode<synchronous>, transform_indices = @transform_3, window_bounds = array<i64: 128, 128>}, {pipeline_mode = #tpu.pipeline_mode<synchronous>, transform_indices = @transform_4, window_bounds = array<i64: 6, 1, 128>}, {pipeline_mode = #tpu.pipeline_mode<synchronous>, transform_indices = @transform_5, window_bounds = array<i64: 1, 128>}, {transform_indices = @transform_6, window_bounds = array<i64: 128, 128>}]} {
    %c0 = arith.constant 0 : index
    %c0_0 = arith.constant 0 : index
    %0 = vector.load %arg1[%c0, %c0_0] : memref<128x128xf32, #tpu.memory_space<vmem>>, vector<128x128xf32>
    %1 = arith.truncf %0 : vector<128x128xf32> to vector<128x128xbf16>
    %c0_1 = arith.constant 0 : index
    %c0_2 = arith.constant 0 : index
    %2 = vector.load %arg2[%c0_1, %c0_2] : memref<128x128xbf16, #tpu.memory_space<vmem>>, vector<128x128xbf16>
    %cst = arith.constant dense<0.000000e+00> : vector<128x128xf32>
    %3 = tpu.matmul %1, %2, %cst {dimension_numbers = #tpu.dot_dimension_numbers<[1], [0], [0], [1], [0, 0, 1, 1], [], []>} : vector<128x128xbf16>, vector<128x128xbf16>, vector<128x128xf32> -> vector<128x128xf32>
    %c0_3 = arith.constant 0 : index
    %c0_4 = arith.constant 0 : index
    %c0_5 = arith.constant 0 : index
    %4 = vector.load %arg5[%c0_3, %c0_4, %c0_5] : memref<6x1x128xf32, #tpu.memory_space<vmem>>, vector<1x1x128xf32>
    %5 = vector.shape_cast %4 : vector<1x1x128xf32> to vector<1x128xf32>
    %6 = vector.broadcast %5 : vector<1x128xf32> to vector<128x128xf32>
    %7 = arith.addf %3, %6 : vector<128x128xf32>
    %8 = arith.negf %7 : vector<128x128xf32>
    %9 = math.exp %8 : vector<128x128xf32>
    %cst_6 = arith.constant 1.000000e+00 : f32
    %10 = vector.broadcast %cst_6 : f32 to vector<128x128xf32>
    %11 = arith.addf %10, %9 : vector<128x128xf32>
    %12 = arith.divf %10, %11 : vector<128x128xf32>
    %13 = arith.mulf %7, %12 : vector<128x128xf32>
    %14 = arith.truncf %13 : vector<128x128xf32> to vector<128x128xbf16>
    %c0_7 = arith.constant 0 : index
    %c0_8 = arith.constant 0 : index
    %c0_9 = arith.constant 0 : index
    %15 = vector.load %arg3[%c0_7, %c0_8, %c0_9] : memref<5x128x128xbf16, #tpu.memory_space<vmem>>, vector<1x128x128xbf16>
    %16 = vector.shape_cast %15 : vector<1x128x128xbf16> to vector<128x128xbf16>
    %cst_10 = arith.constant dense<0.000000e+00> : vector<128x128xf32>
    %17 = tpu.matmul %14, %16, %cst_10 {dimension_numbers = #tpu.dot_dimension_numbers<[1], [0], [0], [1], [0, 0, 1, 1], [], []>} : vector<128x128xbf16>, vector<128x128xbf16>, vector<128x128xf32> -> vector<128x128xf32>
    %c1 = arith.constant 1 : index
    %c0_11 = arith.constant 0 : index
    %c0_12 = arith.constant 0 : index
    %18 = vector.load %arg5[%c1, %c0_11, %c0_12] : memref<6x1x128xf32, #tpu.memory_space<vmem>>, vector<1x1x128xf32>
    %19 = vector.shape_cast %18 : vector<1x1x128xf32> to vector<1x128xf32>
    %20 = vector.broadcast %19 : vector<1x128xf32> to vector<128x128xf32>
    %21 = arith.addf %17, %20 : vector<128x128xf32>
    %22 = arith.negf %21 : vector<128x128xf32>
    %23 = math.exp %22 : vector<128x128xf32>
    %cst_13 = arith.constant 1.000000e+00 : f32
    %24 = vector.broadcast %cst_13 : f32 to vector<128x128xf32>
    %25 = arith.addf %24, %23 : vector<128x128xf32>
    %26 = arith.divf %24, %25 : vector<128x128xf32>
    %27 = arith.mulf %21, %26 : vector<128x128xf32>
    %28 = arith.truncf %27 : vector<128x128xf32> to vector<128x128xbf16>
    %c1_14 = arith.constant 1 : index
    %c0_15 = arith.constant 0 : index
    %c0_16 = arith.constant 0 : index
    %29 = vector.load %arg3[%c1_14, %c0_15, %c0_16] : memref<5x128x128xbf16, #tpu.memory_space<vmem>>, vector<1x128x128xbf16>
    %30 = vector.shape_cast %29 : vector<1x128x128xbf16> to vector<128x128xbf16>
    %cst_17 = arith.constant dense<0.000000e+00> : vector<128x128xf32>
    %31 = tpu.matmul %28, %30, %cst_17 {dimension_numbers = #tpu.dot_dimension_numbers<[1], [0], [0], [1], [0, 0, 1, 1], [], []>} : vector<128x128xbf16>, vector<128x128xbf16>, vector<128x128xf32> -> vector<128x128xf32>
    %c2 = arith.constant 2 : index
    %c0_18 = arith.constant 0 : index
    %c0_19 = arith.constant 0 : index
    %32 = vector.load %arg5[%c2, %c0_18, %c0_19] : memref<6x1x128xf32, #tpu.memory_space<vmem>>, vector<1x1x128xf32>
    %33 = vector.shape_cast %32 : vector<1x1x128xf32> to vector<1x128xf32>
    %34 = vector.broadcast %33 : vector<1x128xf32> to vector<128x128xf32>
    %35 = arith.addf %31, %34 : vector<128x128xf32>
    %36 = arith.negf %35 : vector<128x128xf32>
    %37 = math.exp %36 : vector<128x128xf32>
    %cst_20 = arith.constant 1.000000e+00 : f32
    %38 = vector.broadcast %cst_20 : f32 to vector<128x128xf32>
    %39 = arith.addf %38, %37 : vector<128x128xf32>
    %40 = arith.divf %38, %39 : vector<128x128xf32>
    %41 = arith.mulf %35, %40 : vector<128x128xf32>
    %42 = arith.truncf %41 : vector<128x128xf32> to vector<128x128xbf16>
    %c2_21 = arith.constant 2 : index
    %c0_22 = arith.constant 0 : index
    %c0_23 = arith.constant 0 : index
    %43 = vector.load %arg3[%c2_21, %c0_22, %c0_23] : memref<5x128x128xbf16, #tpu.memory_space<vmem>>, vector<1x128x128xbf16>
    %44 = vector.shape_cast %43 : vector<1x128x128xbf16> to vector<128x128xbf16>
    %cst_24 = arith.constant dense<0.000000e+00> : vector<128x128xf32>
    %45 = tpu.matmul %42, %44, %cst_24 {dimension_numbers = #tpu.dot_dimension_numbers<[1], [0], [0], [1], [0, 0, 1, 1], [], []>} : vector<128x128xbf16>, vector<128x128xbf16>, vector<128x128xf32> -> vector<128x128xf32>
    %c3 = arith.constant 3 : index
    %c0_25 = arith.constant 0 : index
    %c0_26 = arith.constant 0 : index
    %46 = vector.load %arg5[%c3, %c0_25, %c0_26] : memref<6x1x128xf32, #tpu.memory_space<vmem>>, vector<1x1x128xf32>
    %47 = vector.shape_cast %46 : vector<1x1x128xf32> to vector<1x128xf32>
    %48 = vector.broadcast %47 : vector<1x128xf32> to vector<128x128xf32>
    %49 = arith.addf %45, %48 : vector<128x128xf32>
    %50 = arith.negf %49 : vector<128x128xf32>
    %51 = math.exp %50 : vector<128x128xf32>
    %cst_27 = arith.constant 1.000000e+00 : f32
    %52 = vector.broadcast %cst_27 : f32 to vector<128x128xf32>
    %53 = arith.addf %52, %51 : vector<128x128xf32>
    %54 = arith.divf %52, %53 : vector<128x128xf32>
    %55 = arith.mulf %49, %54 : vector<128x128xf32>
    %56 = arith.truncf %55 : vector<128x128xf32> to vector<128x128xbf16>
    %c3_28 = arith.constant 3 : index
    %c0_29 = arith.constant 0 : index
    %c0_30 = arith.constant 0 : index
    %57 = vector.load %arg3[%c3_28, %c0_29, %c0_30] : memref<5x128x128xbf16, #tpu.memory_space<vmem>>, vector<1x128x128xbf16>
    %58 = vector.shape_cast %57 : vector<1x128x128xbf16> to vector<128x128xbf16>
    %cst_31 = arith.constant dense<0.000000e+00> : vector<128x128xf32>
    %59 = tpu.matmul %56, %58, %cst_31 {dimension_numbers = #tpu.dot_dimension_numbers<[1], [0], [0], [1], [0, 0, 1, 1], [], []>} : vector<128x128xbf16>, vector<128x128xbf16>, vector<128x128xf32> -> vector<128x128xf32>
    %c4 = arith.constant 4 : index
    %c0_32 = arith.constant 0 : index
    %c0_33 = arith.constant 0 : index
    %60 = vector.load %arg5[%c4, %c0_32, %c0_33] : memref<6x1x128xf32, #tpu.memory_space<vmem>>, vector<1x1x128xf32>
    %61 = vector.shape_cast %60 : vector<1x1x128xf32> to vector<1x128xf32>
    %62 = vector.broadcast %61 : vector<1x128xf32> to vector<128x128xf32>
    %63 = arith.addf %59, %62 : vector<128x128xf32>
    %64 = arith.negf %63 : vector<128x128xf32>
    %65 = math.exp %64 : vector<128x128xf32>
    %cst_34 = arith.constant 1.000000e+00 : f32
    %66 = vector.broadcast %cst_34 : f32 to vector<128x128xf32>
    %67 = arith.addf %66, %65 : vector<128x128xf32>
    %68 = arith.divf %66, %67 : vector<128x128xf32>
    %69 = arith.mulf %63, %68 : vector<128x128xf32>
    %70 = arith.truncf %69 : vector<128x128xf32> to vector<128x128xbf16>
    %c4_35 = arith.constant 4 : index
    %c0_36 = arith.constant 0 : index
    %c0_37 = arith.constant 0 : index
    %71 = vector.load %arg3[%c4_35, %c0_36, %c0_37] : memref<5x128x128xbf16, #tpu.memory_space<vmem>>, vector<1x128x128xbf16>
    %72 = vector.shape_cast %71 : vector<1x128x128xbf16> to vector<128x128xbf16>
    %cst_38 = arith.constant dense<0.000000e+00> : vector<128x128xf32>
    %73 = tpu.matmul %70, %72, %cst_38 {dimension_numbers = #tpu.dot_dimension_numbers<[1], [0], [0], [1], [0, 0, 1, 1], [], []>} : vector<128x128xbf16>, vector<128x128xbf16>, vector<128x128xf32> -> vector<128x128xf32>
    %c5 = arith.constant 5 : index
    %c0_39 = arith.constant 0 : index
    %c0_40 = arith.constant 0 : index
    %74 = vector.load %arg5[%c5, %c0_39, %c0_40] : memref<6x1x128xf32, #tpu.memory_space<vmem>>, vector<1x1x128xf32>
    %75 = vector.shape_cast %74 : vector<1x1x128xf32> to vector<1x128xf32>
    %76 = vector.broadcast %75 : vector<1x128xf32> to vector<128x128xf32>
    %77 = arith.addf %73, %76 : vector<128x128xf32>
    %78 = arith.negf %77 : vector<128x128xf32>
    %79 = math.exp %78 : vector<128x128xf32>
    %cst_41 = arith.constant 1.000000e+00 : f32
    %80 = vector.broadcast %cst_41 : f32 to vector<128x128xf32>
    %81 = arith.addf %80, %79 : vector<128x128xf32>
    %82 = arith.divf %80, %81 : vector<128x128xf32>
    %83 = arith.mulf %77, %82 : vector<128x128xf32>
    %84 = arith.truncf %83 : vector<128x128xf32> to vector<128x128xbf16>
    %c0_42 = arith.constant 0 : index
    %c0_43 = arith.constant 0 : index
    %85 = vector.load %arg4[%c0_42, %c0_43] : memref<128x128xbf16, #tpu.memory_space<vmem>>, vector<128x128xbf16>
    %cst_44 = arith.constant dense<0.000000e+00> : vector<128x128xf32>
    %86 = tpu.matmul %84, %85, %cst_44 {dimension_numbers = #tpu.dot_dimension_numbers<[1], [0], [0], [1], [0, 0, 1, 1], [], []>} : vector<128x128xbf16>, vector<128x128xbf16>, vector<128x128xf32> -> vector<128x128xf32>
    %c0_45 = arith.constant 0 : index
    %c0_46 = arith.constant 0 : index
    %87 = vector.load %arg6[%c0_45, %c0_46] : memref<1x128xf32, #tpu.memory_space<vmem>>, vector<1x128xf32>
    %88 = vector.broadcast %87 : vector<1x128xf32> to vector<128x128xf32>
    %89 = arith.addf %86, %88 : vector<128x128xf32>
    %c0_47 = arith.constant 0 : index
    %c0_48 = arith.constant 0 : index
    %90 = vector.load %arg7[%c0_47, %c0_48] : memref<128x128xf32, #tpu.memory_space<vmem>>, vector<128x128xf32>
    tpu.vector_store %arg7[%c0_47, %c0_48], %89 {strides = array<i32>} : memref<128x128xf32, #tpu.memory_space<vmem>>, vector<128x128xf32>,
    return
  }
  func.func @transform_0(%arg0: i32) -> (i32, i32) {
    %c0_i32 = arith.constant 0 : i32
    %c0_i32_0 = arith.constant 0 : i32
    return %arg0, %c0_i32 : i32, i32
  }
  func.func @transform_1(%arg0: i32) -> (i32, i32) {
    %c0_i32 = arith.constant 0 : i32
    %c0_i32_0 = arith.constant 0 : i32
    %c0_i32_1 = arith.constant 0 : i32
    return %c0_i32, %c0_i32_0 : i32, i32
  }
  func.func @transform_2(%arg0: i32) -> (i32, i32, i32) {
    %c0_i32 = arith.constant 0 : i32
    %c0_i32_0 = arith.constant 0 : i32
    %c0_i32_1 = arith.constant 0 : i32
    %c0_i32_2 = arith.constant 0 : i32
    return %c0_i32, %c0_i32_0, %c0_i32_1 : i32, i32, i32
  }
  func.func @transform_3(%arg0: i32) -> (i32, i32) {
    %c0_i32 = arith.constant 0 : i32
    %c0_i32_0 = arith.constant 0 : i32
    %c0_i32_1 = arith.constant 0 : i32
    return %c0_i32, %c0_i32_0 : i32, i32
  }
  func.func @transform_4(%arg0: i32) -> (i32, i32, i32) {
    %c0_i32 = arith.constant 0 : i32
    %c0_i32_0 = arith.constant 0 : i32
    %c0_i32_1 = arith.constant 0 : i32
    %c0_i32_2 = arith.constant 0 : i32
    return %c0_i32, %c0_i32_0, %c0_i32_1 : i32, i32, i32
  }
  func.func @transform_5(%arg0: i32) -> (i32, i32) {
    %c0_i32 = arith.constant 0 : i32
    %c0_i32_0 = arith.constant 0 : i32
    %c0_i32_1 = arith.constant 0 : i32
    return %c0_i32, %c0_i32_0 : i32, i32
  }
  func.func @transform_6(%arg0: i32) -> (i32, i32) {
    %c0_i32 = arith.constant 0 : i32
    %c0_i32_0 = arith.constant 0 : i32
    return %arg0, %c0_i32 : i32, i32
  }
}

</mosaic_0001>

<llo_original>
// kernel: mlp_forward.1
$region0: #{mlp_forward.1}
  #allocation0 [shape = 'u32[]', space=smem, size = 0x4, offset = 0x4, fixed_abs, tag = 'smem constant byte address 0x4 - core index']
  #allocation1 [shape = 'u32[144,128]{1,0:T(1,128)}', space=vmem, size = 0x12000, scoped, tag = 'internal scratch']
  %s0 = inlined_call_operand.vmem [shape: f32[256,128], index: 0, kind: input, shape index: {}]
  %s1 = inlined_call_operand.vmem [shape: bf16[128,128], index: 1, kind: input, shape index: {}]
  %s2 = inlined_call_operand.vmem [shape: bf16[5,128,128], index: 2, kind: input, shape index: {}]
  %s3 = inlined_call_operand.vmem [shape: bf16[128,128], index: 3, kind: input, shape index: {}]
  %s4 = inlined_call_operand.vmem [shape: f32[6,1,128], index: 4, kind: input, shape index: {}]
  %s5 = inlined_call_operand.vmem [shape: f32[1,128], index: 5, kind: input, shape index: {}]
  %s6 = inlined_call_operand.vmem [shape: f32[256,128], index: 6, kind: output, shape index: {}]
  %s7 = sld [smem:[#allocation0]]
  $region57: #{mlp_forward.1} parent=0
    _
  %s9 = ssub.s32 1, %s7
  %s10 = scalar_select 0, %s9, %s7
  loop: start=0, step=1, limit=4
  $region2: #{mlp_forward.1} parent=0 // loop_pre_header
    _
  $region3: #{mlp_forward.1} parent=0 // loop_header
    %s12 = sphi 0, %s16
    %p13 = scmp.ge.s32.totalorder %s12, 4
    %s22 = sphi 0, %s24
    %s25 = sphi 0, %s22
    %s26 = sphi 0, %s25
    %s42 = sphi 0, %s26
    %s46 = sphi 0, %s46
    %s48 = sphi 0, %s46
    %s49 = sphi 0, %s48
    %s63 = sphi 0, %s49
    %s67 = sphi 0, %s67
    %s69 = sphi 0, %s67
    %s70 = sphi 0, %s69
    %s84 = sphi 0, %s70
    %s88 = sphi 0, %s88
    %s90 = sphi 0, %s88
    %s91 = sphi 0, %s90
    %s105 = sphi 0, %s91
    %s109 = sphi 0, %s109
    %s111 = sphi 0, %s109
    %s112 = sphi 0, %s111
    %s126 = sphi 0, %s112
    %s130 = sphi 0, %s130
    %s132 = sphi 0, %s130
    %s133 = sphi 0, %s132
    %s147 = sphi 0, %s133
    %s153 = sphi 0, %s155
    %s156 = sphi 0, %s153
    %s157 = sphi 0, %s156
    %s173 = sphi 0, %s157
  $region4: #{mlp_forward.1} parent=0 // loop_header_branch
    %15 = sbr.rel (%p13) target = $region8
  $region5: #{mlp_forward.1} parent=0 // loop_body
    %s17 = ssub.s32 %s12, 1
    %s18 = ssub.s32 %s12, 2
    %s19 = sadd.s32 %s12, 1
    %s20 = ssub.s32 %s12, %s19
    %p21 = scmp.eq.s32.totalorder %s20, 0
    %s23 = sadd.s32 %s22, 1
    %s24 = scalar_select %p21, %s22, %s23
    %p27 = pneg %p21
    %p28 = scmp.eq.s32.totalorder %s12, 1
    %p29 = por %p27, %p28
    %p30 = scmp.ne.s32.totalorder %s22, %s25
    %p31 = scmp.eq.s32.totalorder %s12, 0
    %p32 = por %p30, %p31
    %p33 = scmp.ne.s32.totalorder %s22, %s25
    %p34 = scmp.eq.s32.totalorder %s17, 1
    %p35 = por %p33, %p34
    %p36 = scmp.ne.s32.totalorder %s25, %s26
    %p37 = scmp.eq.s32.totalorder %s17, 0
    %p38 = por %p36, %p37
    %p39 = scmp.ne.s32.totalorder %s25, %s26
    %p40 = scmp.eq.s32.totalorder %s18, 1
    %p41 = por %p39, %p40
    %p43 = scmp.ne.s32.totalorder %s26, %s42
    %p44 = scmp.eq.s32.totalorder %s18, 0
    %p45 = por %p43, %p44
    %s47 = sadd.s32 %s46, 1
    %p50 = scmp.eq.s32.totalorder %s12, 1
    %p51 = scmp.ne.s32.totalorder %s46, %s48
    %p52 = scmp.eq.s32.totalorder %s12, 0
    %p53 = por %p51, %p52
    %p54 = scmp.ne.s32.totalorder %s46, %s48
    %p55 = scmp.eq.s32.totalorder %s17, 1
    %p56 = por %p54, %p55
    %p57 = scmp.ne.s32.totalorder %s48, %s49
    %p58 = scmp.eq.s32.totalorder %s17, 0
    %p59 = por %p57, %p58
    %p60 = scmp.ne.s32.totalorder %s48, %s49
    %p61 = scmp.eq.s32.totalorder %s18, 1
    %p62 = por %p60, %p61
    %p64 = scmp.ne.s32.totalorder %s49, %s63
    %p65 = scmp.eq.s32.totalorder %s18, 0
    %p66 = por %p64, %p65
    %s68 = sadd.s32 %s67, 1
    %p71 = scmp.eq.s32.totalorder %s12, 1
    %p72 = scmp.ne.s32.totalorder %s67, %s69
    %p73 = scmp.eq.s32.totalorder %s12, 0
    %p74 = por %p72, %p73
    %p75 = scmp.ne.s32.totalorder %s67, %s69
    %p76 = scmp.eq.s32.totalorder %s17, 1
    %p77 = por %p75, %p76
    %p78 = scmp.ne.s32.totalorder %s69, %s70
    %p79 = scmp.eq.s32.totalorder %s17, 0
    %p80 = por %p78, %p79
    %p81 = scmp.ne.s32.totalorder %s69, %s70
    %p82 = scmp.eq.s32.totalorder %s18, 1
    %p83 = por %p81, %p82
    %p85 = scmp.ne.s32.totalorder %s70, %s84
    %p86 = scmp.eq.s32.totalorder %s18, 0
    %p87 = por %p85, %p86
    %s89 = sadd.s32 %s88, 1
    %p92 = scmp.eq.s32.totalorder %s12, 1
    %p93 = scmp.ne.s32.totalorder %s88, %s90
    %p94 = scmp.eq.s32.totalorder %s12, 0
    %p95 = por %p93, %p94
    %p96 = scmp.ne.s32.totalorder %s88, %s90
    %p97 = scmp.eq.s32.totalorder %s17, 1
    %p98 = por %p96, %p97
    %p99 = scmp.ne.s32.totalorder %s90, %s91
    %p100 = scmp.eq.s32.totalorder %s17, 0
    %p101 = por %p99, %p100
    %p102 = scmp.ne.s32.totalorder %s90, %s91
    %p103 = scmp.eq.s32.totalorder %s18, 1
    %p104 = por %p102, %p103
    %p106 = scmp.ne.s32.totalorder %s91, %s105
    %p107 = scmp.eq.s32.totalorder %s18, 0
    %p108 = por %p106, %p107
    %s110 = sadd.s32 %s109, 1
    %p113 = scmp.eq.s32.totalorder %s12, 1
    %p114 = scmp.ne.s32.totalorder %s109, %s111
    %p115 = scmp.eq.s32.totalorder %s12, 0
    %p116 = por %p114, %p115
    %p117 = scmp.ne.s32.totalorder %s109, %s111
    %p118 = scmp.eq.s32.totalorder %s17, 1
    %p119 = por %p117, %p118
    %p120 = scmp.ne.s32.totalorder %s111, %s112
    %p121 = scmp.eq.s32.totalorder %s17, 0
    %p122 = por %p120, %p121
    %p123 = scmp.ne.s32.totalorder %s111, %s112
    %p124 = scmp.eq.s32.totalorder %s18, 1
    %p125 = por %p123, %p124
    %p127 = scmp.ne.s32.totalorder %s112, %s126
    %p128 = scmp.eq.s32.totalorder %s18, 0
    %p129 = por %p127, %p128
    %s131 = sadd.s32 %s130, 1
    %p134 = scmp.eq.s32.totalorder %s12, 1
    %p135 = scmp.ne.s32.totalorder %s130, %s132
    %p136 = scmp.eq.s32.totalorder %s12, 0
    %p137 = por %p135, %p136
    %p138 = scmp.ne.s32.totalorder %s130, %s132
    %p139 = scmp.eq.s32.totalorder %s17, 1
    %p140 = por %p138, %p139
    %p141 = scmp.ne.s32.totalorder %s132, %s133
    %p142 = scmp.eq.s32.totalorder %s17, 0
    %p143 = por %p141, %p142
    %p144 = scmp.ne.s32.totalorder %s132, %s133
    %p145 = scmp.eq.s32.totalorder %s18, 1
    %p146 = por %p144, %p145
    %p148 = scmp.ne.s32.totalorder %s133, %s147
    %p149 = scmp.eq.s32.totalorder %s18, 0
    %p150 = por %p148, %p149
    %s151 = ssub.s32 %s12, %s19
    %p152 = scmp.eq.s32.totalorder %s151, 0
    %s154 = sadd.s32 %s153, 1
    %s155 = scalar_select %p152, %s153, %s154
    %p158 = pneg %p152
    %p159 = scmp.eq.s32.totalorder %s12, 1
    %p160 = por %p158, %p159
    %p161 = scmp.ne.s32.totalorder %s153, %s156
    %p162 = scmp.eq.s32.totalorder %s12, 0
    %p163 = por %p161, %p162
    %p164 = scmp.ne.s32.totalorder %s153, %s156
    %p165 = scmp.eq.s32.totalorder %s17, 1
    %p166 = por %p164, %p165
    %p167 = scmp.ne.s32.totalorder %s156, %s157
    %p168 = scmp.eq.s32.totalorder %s17, 0
    %p169 = por %p167, %p168
    %p170 = scmp.ne.s32.totalorder %s156, %s157
    %p171 = scmp.eq.s32.totalorder %s18, 1
    %p172 = por %p170, %p171
    %p174 = scmp.ne.s32.totalorder %s157, %s173
    %p175 = scmp.eq.s32.totalorder %s18, 0
    %p176 = por %p174, %p175
    %p177 = scmp.le.s32.totalorder 1, %s12
    %p178 = scmp.lt.s32.totalorder %s12, 3
    %p179 = pnand %p177, %p178
    %p180 = pneg %p179
    // Predicated region
    $region9: #{mlp_forward.1} parent=5 // pred_check
      _
    $region10: #{mlp_forward.1} parent=5 // pred_check_branch
      %182 = sbr.rel (%p179) target = $region12
    $region11: #{mlp_forward.1} parent=5 // pred_region
      %s183 = ssub.s32 %s12, 1
      // Predicated region
      $region13: #{mlp_forward.1} parent=11 // pred_check
        %p184 = pneg %p59
      $region14: #{mlp_forward.1} parent=11 // pred_check_branch
        %186 = sbr.rel (%p184) target = $region16
      $region15: #{mlp_forward.1} parent=11 // pred_region
        _
      $region16: #{mlp_forward.1} parent=11 // pred_fallthru
        _
      // Predicated region
      $region17: #{mlp_forward.1} parent=11 // pred_check
        %p187 = pneg %p80
      $region18: #{mlp_forward.1} parent=11 // pred_check_branch
        %189 = sbr.rel (%p187) target = $region20
      $region19: #{mlp_forward.1} parent=11 // pred_region
        _
      $region20: #{mlp_forward.1} parent=11 // pred_fallthru
        _
      // Predicated region
      $region21: #{mlp_forward.1} parent=11 // pred_check
        %p190 = pneg %p101
      $region22: #{mlp_forward.1} parent=11 // pred_check_branch
        %192 = sbr.rel (%p190) target = $region24
      $region23: #{mlp_forward.1} parent=11 // pred_region
        _
      $region24: #{mlp_forward.1} parent=11 // pred_fallthru
        _
      // Predicated region
      $region25: #{mlp_forward.1} parent=11 // pred_check
        %p193 = pneg %p122
      $region26: #{mlp_forward.1} parent=11 // pred_check_branch
        %195 = sbr.rel (%p193) target = $region28
      $region27: #{mlp_forward.1} parent=11 // pred_region
        _
      $region28: #{mlp_forward.1} parent=11 // pred_fallthru
        _
      // Predicated region
      $region29: #{mlp_forward.1} parent=11 // pred_check
        %p196 = pneg %p143
      $region30: #{mlp_forward.1} parent=11 // pred_check_branch
        %198 = sbr.rel (%p196) target = $region32
      $region31: #{mlp_forward.1} parent=11 // pred_region
        _
      $region32: #{mlp_forward.1} parent=11 // pred_fallthru
        _
    $region12: #{mlp_forward.1} parent=5 // pred_fallthru
      _
    %p199 = scmp.lt.s32.totalorder %s12, 2
    // Predicated region
    $region33: #{mlp_forward.1} parent=5 // pred_check
      %p200 = pneg %p199
    $region34: #{mlp_forward.1} parent=5 // pred_check_branch
      %202 = sbr.rel (%p200) target = $region36
    $region35: #{mlp_forward.1} parent=5 // pred_region
      // Predicated region
      $region37: #{mlp_forward.1} parent=35 // pred_check
        %p203 = pneg %p32
      $region38: #{mlp_forward.1} parent=35 // pred_check_branch
        %205 = sbr.rel (%p203) target = $region40
      $region39: #{mlp_forward.1} parent=35 // pred_region
        %s206 = smul.u32 16, %s12
        %p207 = scmp.lt.s32.totalorder %s206, 31
        %s208 = scalar_select %p207, %s206, 31
        %s209 = smul.addr %s208, 8
        %s210 = scalar_lea.vmem %s0, %s209
        %s211 = smul.u32 16, %s12
      $region40: #{mlp_forward.1} parent=35 // pred_fallthru
        _
    $region36: #{mlp_forward.1} parent=5 // pred_fallthru
      _
    %p212 = scmp.le.s32.totalorder 1, %s12
    %p213 = scmp.lt.s32.totalorder %s12, 3
    %p214 = pnand %p212, %p213
    %p215 = pneg %p214
    // Predicated region
    $region41: #{mlp_forward.1} parent=5 // pred_check
      _
    $region42: #{mlp_forward.1} parent=5 // pred_check_branch
      %217 = sbr.rel (%p214) target = $region44
    $region43: #{mlp_forward.1} parent=5 // pred_region
      %s218 = ssub.s32 %s12, 1
      %s219 = smul.u32 16, %s17
      %p220 = scmp.lt.s32.totalorder %s219, 31
      %s221 = scalar_select %p220, %s219, 31
      %s222 = smul.addr %s221, 8
      %s223 = scalar_lea.vmem %s0, %s222
      %p224 = pneg %p38
      %p225 = pneg %p35
      %p226 = pneg %p59
      %p227 = pneg %p56
      %p228 = pneg %p80
      %p229 = pneg %p77
      %p230 = pneg %p101
      %p231 = pneg %p98
      %p232 = pneg %p122
      %p233 = pneg %p119
      %p234 = pneg %p143
      %p235 = pneg %p140
      %p236 = pneg %p169
      %p237 = pneg %p166
      %s238 = smul.u32 16, %s17
      %p239 = scmp.lt.s32.totalorder %s238, 31
      %s240 = scalar_select %p239, %s238, 31
      %s241 = smul.addr %s240, 8
      %s242 = scalar_lea.vmem %s6, %s241
      %s243 = smul.u32 16, %s17
      %p244 = scmp.lt.s32.totalorder %s243, 31
      %s245 = scalar_select %p244, %s243, 31
      %s246 = smul.addr %s245, 8
      %s247 = scalar_lea.vmem %s0, %s246
      %s248 = smul.u32 16, %s17
      %s249 = smul.u32 16, %s17
      %p250 = scmp.lt.s32.totalorder %s249, 31
      %s251 = scalar_select %p250, %s249, 31
      %s252 = smul.addr %s251, 8
      %s253 = scalar_lea.vmem %s6, %s252
      %s254 = smul.u32 16, %s17
      %v256 = vld [vmem:[%s247] sm:$0xff]
      %v257 = vld [vmem:[%s247 + $0x8] sm:$0xff]
      %v258 = vld [vmem:[%s247 + $0x10] sm:$0xff]
      %v259 = vld [vmem:[%s247 + $0x18] sm:$0xff]
      %v260 = vld [vmem:[%s247 + $0x20] sm:$0xff]
      %v261 = vld [vmem:[%s247 + $0x28] sm:$0xff]
      %v262 = vld [vmem:[%s247 + $0x30] sm:$0xff]
      %v263 = vld [vmem:[%s247 + $0x38] sm:$0xff]
      %v264 = vld [vmem:[%s247 + $0x40] sm:$0xff]
      %v265 = vld [vmem:[%s247 + $0x48] sm:$0xff]
      %v266 = vld [vmem:[%s247 + $0x50] sm:$0xff]
      %v267 = vld [vmem:[%s247 + $0x58] sm:$0xff]
      %v268 = vld [vmem:[%s247 + $0x60] sm:$0xff]
      %v269 = vld [vmem:[%s247 + $0x68] sm:$0xff]
      %v270 = vld [vmem:[%s247 + $0x70] sm:$0xff]
      %v271 = vld [vmem:[%s247 + $0x78] sm:$0xff]
      %v272 = vpack.c.bf16 %v257, %v256
      %v273 = vpack.c.bf16 %v259, %v258
      %v274 = vpack.c.bf16 %v261, %v260
      %v275 = vpack.c.bf16 %v263, %v262
      %v276 = vpack.c.bf16 %v265, %v264
      %v277 = vpack.c.bf16 %v267, %v266
      %v278 = vpack.c.bf16 %v269, %v268
      %v279 = vpack.c.bf16 %v271, %v270
      %v280 = vld [vmem:[%s1] sm:$0xf]
      %v281 = vld [vmem:[%s1 + $0x4] sm:$0xf]
      %v282 = vld [vmem:[%s1 + $0x8] sm:$0xf]
      %v283 = vld [vmem:[%s1 + $0xc] sm:$0xf]
      %v284 = vld [vmem:[%s1 + $0x10] sm:$0xf]
      %v285 = vld [vmem:[%s1 + $0x14] sm:$0xf]
      %v286 = vld [vmem:[%s1 + $0x18] sm:$0xf]
      %v287 = vld [vmem:[%s1 + $0x1c] sm:$0xf]
      %v288 = vld [vmem:[%s1 + $0x20] sm:$0xf]
      %v289 = vld [vmem:[%s1 + $0x24] sm:$0xf]
      %v290 = vld [vmem:[%s1 + $0x28] sm:$0xf]
      %v291 = vld [vmem:[%s1 + $0x2c] sm:$0xf]
      %v292 = vld [vmem:[%s1 + $0x30] sm:$0xf]
      %v293 = vld [vmem:[%s1 + $0x34] sm:$0xf]
      %v294 = vld [vmem:[%s1 + $0x38] sm:$0xf]
      %v295 = vld [vmem:[%s1 + $0x3c] sm:$0xf]
      %v296 = vld [vmem:[%s4] sm:$0x1]
      %v298 = vlaneseq
      %v299 = vshrl.u32 %v298, 7
      %v300 = vsub.s32 0, %v299
      %v301 = vrot.slane %v296, %v300
      %v319 = vunpack.c.l.b16 %v280
      %v320 = vunpack.c.l.b16 %v281
      %v321 = vunpack.c.l.b16 %v282
      %v322 = vunpack.c.l.b16 %v283
      %v323 = vunpack.c.l.b16 %v284
      %v324 = vunpack.c.l.b16 %v285
      %v325 = vunpack.c.l.b16 %v286
      %v326 = vunpack.c.l.b16 %v287
      %v327 = vunpack.c.l.b16 %v288
      %v328 = vunpack.c.l.b16 %v289
      %v329 = vunpack.c.l.b16 %v290
      %v330 = vunpack.c.l.b16 %v291
      %v331 = vunpack.c.l.b16 %v292
      %v332 = vunpack.c.l.b16 %v293
      %v333 = vunpack.c.l.b16 %v294
      %v334 = vunpack.c.l.b16 %v295
      %v335 = vpack.c.b16 %v320, %v319
      %v336 = vpack.c.b16 %v322, %v321
      %v337 = vpack.c.b16 %v324, %v323
      %v338 = vpack.c.b16 %v326, %v325
      %v339 = vpack.c.b16 %v328, %v327
      %v340 = vpack.c.b16 %v330, %v329
      %v341 = vpack.c.b16 %v332, %v331
      %v342 = vpack.c.b16 %v334, %v333
      %351 = vmatprep.subr.bf16.mxu0 0
      %352 = vmatpush1.bf16.msra.mxu0 %v335
      %353 = vmatprep.subr.bf16.mxu0 0
      %354 = vmatpush1.bf16.msra.mxu0 %v336
      %355 = vmatprep.subr.bf16.mxu0 0
      %356 = vmatpush1.bf16.msra.mxu0 %v337
      %357 = vmatprep.subr.bf16.mxu0 0
      %358 = vmatpush1.bf16.msra.mxu0 %v338
      %359 = vmatprep.subr.bf16.mxu0 0
      %360 = vmatpush1.bf16.msra.mxu0 %v339
      %361 = vmatprep.subr.bf16.mxu0 0
      %362 = vmatpush1.bf16.msra.mxu0 %v340
      %363 = vmatprep.subr.bf16.mxu0 0
      %364 = vmatpush1.bf16.msra.mxu0 %v341
      %365 = vmatprep.subr.bf16.mxu0 0
      %366 = vmatpush1.bf16.msra.mxu0 %v342
      %367 = vmatprep.subr.bf16.mxu0 0
      %368 = vmatpush1.bf16.msra.mxu0 0
      %369 = vmatprep.subr.bf16.mxu0 0
      %370 = vmatpush1.bf16.msra.mxu0 0
      %371 = vmatprep.subr.bf16.mxu0 0
      %372 = vmatpush1.bf16.msra.mxu0 0
      %373 = vmatprep.subr.bf16.mxu0 0
      %374 = vmatpush1.bf16.msra.mxu0 0
      %375 = vmatprep.subr.bf16.mxu0 0
      %376 = vmatpush1.bf16.msra.mxu0 0
      %377 = vmatprep.subr.bf16.mxu0 0
      %378 = vmatpush1.bf16.msra.mxu0 0
      %379 = vmatprep.subr.bf16.mxu0 0
      %380 = vmatpush1.bf16.msra.mxu0 0
      %381 = vmatprep.subr.bf16.mxu0 0
      %382 = vmatpush1.bf16.msra.mxu0 0
      %383 = vmatprep.mubr.bf16.mxu0 0
      %384 = vmatmul.mubr.bf16.gmra.mrb[0].mxu0 %v272
      %v385 = vpop.f32.mrb[0].mxu0
      %v386 = vadd.f32 %v301, %v385
      %v387 = vpop.f32.mrb[0].mxu0
      %v388 = vpop.f32.mrb[0].mxu0
      %v389 = vadd.f32 %v301, %v388
      %v390 = vpop.f32.mrb[0].mxu0
      %391 = vmatprep.mubr.bf16.mxu0 0
      %392 = vmatmul.mubr.bf16.gmra.mrb[0].mxu0 %v273
      %v393 = vpop.f32.mrb[0].mxu0
      %v394 = vadd.f32 %v301, %v393
      %v395 = vpop.f32.mrb[0].mxu0
      %v396 = vpop.f32.mrb[0].mxu0
      %v397 = vadd.f32 %v301, %v396
      %v398 = vpop.f32.mrb[0].mxu0
      %399 = vmatprep.mubr.bf16.mxu0 0
      %400 = vmatmul.mubr.bf16.gmra.mrb[0].mxu0 %v274
      %v401 = vpop.f32.mrb[0].mxu0
      %v402 = vadd.f32 %v301, %v401
      %v403 = vpop.f32.mrb[0].mxu0
      %v404 = vpop.f32.mrb[0].mxu0
      %v405 = vadd.f32 %v301, %v404
      %v406 = vpop.f32.mrb[0].mxu0
      %407 = vmatprep.mubr.bf16.mxu0 0
      %408 = vmatmul.mubr.bf16.gmra.mrb[0].mxu0 %v275
      %v409 = vpop.f32.mrb[0].mxu0
      %v410 = vadd.f32 %v301, %v409
      %v411 = vpop.f32.mrb[0].mxu0
      %v412 = vpop.f32.mrb[0].mxu0
      %v413 = vadd.f32 %v301, %v412
      %v414 = vpop.f32.mrb[0].mxu0
      %415 = vmatprep.mubr.bf16.mxu0 0
      %416 = vmatmul.mubr.bf16.gmra.mrb[0].mxu0 %v276
      %v417 = vpop.f32.mrb[0].mxu0
      %v418 = vadd.f32 %v301, %v417
      %v419 = vpop.f32.mrb[0].mxu0
      %v420 = vpop.f32.mrb[0].mxu0
      %v421 = vadd.f32 %v301, %v420
      %v422 = vpop.f32.mrb[0].mxu0
      %423 = vmatprep.mubr.bf16.mxu0 0
      %424 = vmatmul.mubr.bf16.gmra.mrb[0].mxu0 %v277
      %v425 = vpop.f32.mrb[0].mxu0
      %v426 = vadd.f32 %v301, %v425
      %v427 = vpop.f32.mrb[0].mxu0
      %v428 = vpop.f32.mrb[0].mxu0
      %v429 = vadd.f32 %v301, %v428
      %v430 = vpop.f32.mrb[0].mxu0
      %431 = vmatprep.mubr.bf16.mxu0 0
      %432 = vmatmul.mubr.bf16.gmra.mrb[0].mxu0 %v278
      %v433 = vpop.f32.mrb[0].mxu0
      %v434 = vadd.f32 %v301, %v433
      %v435 = vpop.f32.mrb[0].mxu0
      %v436 = vpop.f32.mrb[0].mxu0
      %v437 = vadd.f32 %v301, %v436
      %v438 = vpop.f32.mrb[0].mxu0
      %439 = vmatprep.mubr.bf16.mxu0 0
      %440 = vmatmul.mubr.bf16.gmra.mrb[0].mxu0 %v279
      %v441 = vpop.f32.mrb[0].mxu0
      %v442 = vadd.f32 %v301, %v441
      %v443 = vpop.f32.mrb[0].mxu0
      %v444 = vpop.f32.mrb[0].mxu0
      %v445 = vadd.f32 %v301, %v444
      %v446 = vpop.f32.mrb[0].mxu0
      %447 = vdwg.mxu0
      %v448 = vxor.u32 %v386, 2147483648
      %v449 = vxor.u32 %v389, 2147483648
      %v450 = vxor.u32 %v394, 2147483648
      %v451 = vxor.u32 %v397, 2147483648
      %v452 = vxor.u32 %v402, 2147483648
      %v453 = vxor.u32 %v405, 2147483648
      %v454 = vxor.u32 %v410, 2147483648
      %v455 = vxor.u32 %v413, 2147483648
      %v456 = vxor.u32 %v418, 2147483648
      %v457 = vxor.u32 %v421, 2147483648
      %v458 = vxor.u32 %v426, 2147483648
      %v459 = vxor.u32 %v429, 2147483648
      %v460 = vxor.u32 %v434, 2147483648
      %v461 = vxor.u32 %v437, 2147483648
      %v462 = vxor.u32 %v442, 2147483648
      %v463 = vxor.u32 %v445, 2147483648
      %v464 = vmul.f32 %v448, 1.442695
      %v465 = vpow.pop %v464
      %v466 = vmul.f32 %v449, 1.442695
      %v467 = vpow.pop %v466
      %v468 = vmul.f32 %v450, 1.442695
      %v469 = vpow.pop %v468
      %v470 = vmul.f32 %v451, 1.442695
      %v471 = vpow.pop %v470
      %v472 = vmul.f32 %v452, 1.442695
      %v473 = vpow.pop %v472
      %v474 = vmul.f32 %v453, 1.442695
      %v475 = vpow.pop %v474
      %v476 = vmul.f32 %v454, 1.442695
      %v477 = vpow.pop %v476
      %v478 = vmul.f32 %v455, 1.442695
      %v479 = vpow.pop %v478
      %v480 = vmul.f32 %v456, 1.442695
      %v481 = vpow.pop %v480
      %v482 = vmul.f32 %v457, 1.442695
      %v483 = vpow.pop %v482
      %v484 = vmul.f32 %v458, 1.442695
      %v485 = vpow.pop %v484
      %v486 = vmul.f32 %v459, 1.442695
      %v487 = vpow.pop %v486
      %v488 = vmul.f32 %v460, 1.442695
      %v489 = vpow.pop %v488
      %v490 = vmul.f32 %v461, 1.442695
      %v491 = vpow.pop %v490
      %v492 = vmul.f32 %v462, 1.442695
      %v493 = vpow.pop %v492
      %v494 = vmul.f32 %v463, 1.442695
      %v495 = vpow.pop %v494
      %v496 = vadd.f32 %v465, 1.0
      %v497 = vadd.f32 %v467, 1.0
      %v498 = vadd.f32 %v469, 1.0
      %v499 = vadd.f32 %v471, 1.0
      %v500 = vadd.f32 %v473, 1.0
      %v501 = vadd.f32 %v475, 1.0
      %v502 = vadd.f32 %v477, 1.0
      %v503 = vadd.f32 %v479, 1.0
      %v504 = vadd.f32 %v481, 1.0
      %v505 = vadd.f32 %v483, 1.0
      %v506 = vadd.f32 %v485, 1.0
      %v507 = vadd.f32 %v487, 1.0
      %v508 = vadd.f32 %v489, 1.0
      %v509 = vadd.f32 %v491, 1.0
      %v510 = vadd.f32 %v493, 1.0
      %v511 = vadd.f32 %v495, 1.0
      %v512 = vrcp.pop %v496
      %v513 = vmul.f32 1.0, %v512
      %v514 = vrcp.pop %v497
      %v515 = vmul.f32 1.0, %v514
      %v516 = vrcp.pop %v498
      %v517 = vmul.f32 1.0, %v516
      %v518 = vrcp.pop %v499
      %v519 = vmul.f32 1.0, %v518
      %v520 = vrcp.pop %v500
      %v521 = vmul.f32 1.0, %v520
      %v522 = vrcp.pop %v501
      %v523 = vmul.f32 1.0, %v522
      %v524 = vrcp.pop %v502
      %v525 = vmul.f32 1.0, %v524
      %v526 = vrcp.pop %v503
      %v527 = vmul.f32 1.0, %v526
      %v528 = vrcp.pop %v504
      %v529 = vmul.f32 1.0, %v528
      %v530 = vrcp.pop %v505
      %v531 = vmul.f32 1.0, %v530
      %v532 = vrcp.pop %v506
      %v533 = vmul.f32 1.0, %v532
      %v534 = vrcp.pop %v507
      %v535 = vmul.f32 1.0, %v534
      %v536 = vrcp.pop %v508
      %v537 = vmul.f32 1.0, %v536
      %v538 = vrcp.pop %v509
      %v539 = vmul.f32 1.0, %v538
      %v540 = vrcp.pop %v510
      %v541 = vmul.f32 1.0, %v540
      %v542 = vrcp.pop %v511
      %v543 = vmul.f32 1.0, %v542
      %v544 = vmul.f32 %v386, %v513
      %v545 = vmul.f32 %v389, %v515
      %v546 = vmul.f32 %v394, %v517
      %v547 = vmul.f32 %v397, %v519
      %v548 = vmul.f32 %v402, %v521
      %v549 = vmul.f32 %v405, %v523
      %v550 = vmul.f32 %v410, %v525
      %v551 = vmul.f32 %v413, %v527
      %v552 = vmul.f32 %v418, %v529
      %v553 = vmul.f32 %v421, %v531
      %v554 = vmul.f32 %v426, %v533
      %v555 = vmul.f32 %v429, %v535
      %v556 = vmul.f32 %v434, %v537
      %v557 = vmul.f32 %v437, %v539
      %v558 = vmul.f32 %v442, %v541
      %v559 = vmul.f32 %v445, %v543
      %v560 = vpack.c.bf16 %v545, %v544
      %v561 = vpack.c.bf16 %v547, %v546
      %v562 = vpack.c.bf16 %v549, %v548
      %v563 = vpack.c.bf16 %v551, %v550
      %v564 = vpack.c.bf16 %v553, %v552
      %v565 = vpack.c.bf16 %v555, %v554
      %v566 = vpack.c.bf16 %v557, %v556
      %v567 = vpack.c.bf16 %v559, %v558
      %v568 = vld [vmem:[%s2] sm:$0xf]
      %v569 = vld [vmem:[%s2 + $0x4] sm:$0xf]
      %v570 = vld [vmem:[%s2 + $0x8] sm:$0xf]
      %v571 = vld [vmem:[%s2 + $0xc] sm:$0xf]
      %v572 = vld [vmem:[%s2 + $0x10] sm:$0xf]
      %v573 = vld [vmem:[%s2 + $0x14] sm:$0xf]
      %v574 = vld [vmem:[%s2 + $0x18] sm:$0xf]
      %v575 = vld [vmem:[%s2 + $0x1c] sm:$0xf]
      %v576 = vld [vmem:[%s2 + $0x20] sm:$0xf]
      %v577 = vld [vmem:[%s2 + $0x24] sm:$0xf]
      %v578 = vld [vmem:[%s2 + $0x28] sm:$0xf]
      %v579 = vld [vmem:[%s2 + $0x2c] sm:$0xf]
      %v580 = vld [vmem:[%s2 + $0x30] sm:$0xf]
      %v581 = vld [vmem:[%s2 + $0x34] sm:$0xf]
      %v582 = vld [vmem:[%s2 + $0x38] sm:$0xf]
      %v583 = vld [vmem:[%s2 + $0x3c] sm:$0xf]
      %s584 = scalar_lea.vmem %s4, 1
      %v585 = vld [vmem:[%s584] sm:$0x1]
      %v587 = vlaneseq
      %v588 = vshrl.u32 %v587, 7
      %v589 = vsub.s32 0, %v588
      %v590 = vrot.slane %v585, %v589
      %v608 = vunpack.c.l.b16 %v568
      %v609 = vunpack.c.l.b16 %v569
      %v610 = vunpack.c.l.b16 %v570
      %v611 = vunpack.c.l.b16 %v571
      %v612 = vunpack.c.l.b16 %v572
      %v613 = vunpack.c.l.b16 %v573
      %v614 = vunpack.c.l.b16 %v574
      %v615 = vunpack.c.l.b16 %v575
      %v616 = vunpack.c.l.b16 %v576
      %v617 = vunpack.c.l.b16 %v577
      %v618 = vunpack.c.l.b16 %v578
      %v619 = vunpack.c.l.b16 %v579
      %v620 = vunpack.c.l.b16 %v580
      %v621 = vunpack.c.l.b16 %v581
      %v622 = vunpack.c.l.b16 %v582
      %v623 = vunpack.c.l.b16 %v583
      %v624 = vpack.c.b16 %v609, %v608
      %v625 = vpack.c.b16 %v611, %v610
      %v626 = vpack.c.b16 %v613, %v612
      %v627 = vpack.c.b16 %v615, %v614
      %v628 = vpack.c.b16 %v617, %v616
      %v629 = vpack.c.b16 %v619, %v618
      %v630 = vpack.c.b16 %v621, %v620
      %v631 = vpack.c.b16 %v623, %v622
      %640 = vmatprep.subr.bf16.mxu0 0
      %641 = vmatpush1.bf16.msra.mxu0 %v624
      %642 = vmatprep.subr.bf16.mxu0 0
      %643 = vmatpush1.bf16.msra.mxu0 %v625
      %644 = vmatprep.subr.bf16.mxu0 0
      %645 = vmatpush1.bf16.msra.mxu0 %v626
      %646 = vmatprep.subr.bf16.mxu0 0
      %647 = vmatpush1.bf16.msra.mxu0 %v627
      %648 = vmatprep.subr.bf16.mxu0 0
      %649 = vmatpush1.bf16.msra.mxu0 %v628
      %650 = vmatprep.subr.bf16.mxu0 0
      %651 = vmatpush1.bf16.msra.mxu0 %v629
      %652 = vmatprep.subr.bf16.mxu0 0
      %653 = vmatpush1.bf16.msra.mxu0 %v630
      %654 = vmatprep.subr.bf16.mxu0 0
      %655 = vmatpush1.bf16.msra.mxu0 %v631
      %656 = vmatprep.subr.bf16.mxu0 0
      %657 = vmatpush1.bf16.msra.mxu0 0
      %658 = vmatprep.subr.bf16.mxu0 0
      %659 = vmatpush1.bf16.msra.mxu0 0
      %660 = vmatprep.subr.bf16.mxu0 0
      %661 = vmatpush1.bf16.msra.mxu0 0
      %662 = vmatprep.subr.bf16.mxu0 0
      %663 = vmatpush1.bf16.msra.mxu0 0
      %664 = vmatprep.subr.bf16.mxu0 0
      %665 = vmatpush1.bf16.msra.mxu0 0
      %666 = vmatprep.subr.bf16.mxu0 0
      %667 = vmatpush1.bf16.msra.mxu0 0
      %668 = vmatprep.subr.bf16.mxu0 0
      %669 = vmatpush1.bf16.msra.mxu0 0
      %670 = vmatprep.subr.bf16.mxu0 0
      %671 = vmatpush1.bf16.msra.mxu0 0
      %672 = vmatprep.mubr.bf16.mxu0 0
      %673 = vmatmul.mubr.bf16.gmra.mrb[0].mxu0 %v560
      %v674 = vpop.f32.mrb[0].mxu0
      %v675 = vadd.f32 %v590, %v674
      %v676 = vpop.f32.mrb[0].mxu0
      %v677 = vpop.f32.mrb[0].mxu0
      %v678 = vadd.f32 %v590, %v677
      %v679 = vpop.f32.mrb[0].mxu0
      %680 = vmatprep.mubr.bf16.mxu0 0
      %681 = vmatmul.mubr.bf16.gmra.mrb[0].mxu0 %v561
      %v682 = vpop.f32.mrb[0].mxu0
      %v683 = vadd.f32 %v590, %v682
      %v684 = vpop.f32.mrb[0].mxu0
      %v685 = vpop.f32.mrb[0].mxu0
      %v686 = vadd.f32 %v590, %v685
      %v687 = vpop.f32.mrb[0].mxu0
      %688 = vmatprep.mubr.bf16.mxu0 0
      %689 = vmatmul.mubr.bf16.gmra.mrb[0].mxu0 %v562
      %v690 = vpop.f32.mrb[0].mxu0
      %v691 = vadd.f32 %v590, %v690
      %v692 = vpop.f32.mrb[0].mxu0
      %v693 = vpop.f32.mrb[0].mxu0
      %v694 = vadd.f32 %v590, %v693
      %v695 = vpop.f32.mrb[0].mxu0
      %696 = vmatprep.mubr.bf16.mxu0 0
      %697 = vmatmul.mubr.bf16.gmra.mrb[0].mxu0 %v563
      %v698 = vpop.f32.mrb[0].mxu0
      %v699 = vadd.f32 %v590, %v698
      %v700 = vpop.f32.mrb[0].mxu0
      %v701 = vpop.f32.mrb[0].mxu0
      %v702 = vadd.f32 %v590, %v701
      %v703 = vpop.f32.mrb[0].mxu0
      %704 = vmatprep.mubr.bf16.mxu0 0
      %705 = vmatmul.mubr.bf16.gmra.mrb[0].mxu0 %v564
      %v706 = vpop.f32.mrb[0].mxu0
      %v707 = vadd.f32 %v590, %v706
      %v708 = vpop.f32.mrb[0].mxu0
      %v709 = vpop.f32.mrb[0].mxu0
      %v710 = vadd.f32 %v590, %v709
      %v711 = vpop.f32.mrb[0].mxu0
      %712 = vmatprep.mubr.bf16.mxu0 0
      %713 = vmatmul.mubr.bf16.gmra.mrb[0].mxu0 %v565
      %v714 = vpop.f32.mrb[0].mxu0
      %v715 = vadd.f32 %v590, %v714
      %v716 = vpop.f32.mrb[0].mxu0
      %v717 = vpop.f32.mrb[0].mxu0
      %v718 = vadd.f32 %v590, %v717
      %v719 = vpop.f32.mrb[0].mxu0
      %720 = vmatprep.mubr.bf16.mxu0 0
      %721 = vmatmul.mubr.bf16.gmra.mrb[0].mxu0 %v566
      %v722 = vpop.f32.mrb[0].mxu0
      %v723 = vadd.f32 %v590, %v722
      %v724 = vpop.f32.mrb[0].mxu0
      %v725 = vpop.f32.mrb[0].mxu0
      %v726 = vadd.f32 %v590, %v725
      %v727 = vpop.f32.mrb[0].mxu0
      %728 = vmatprep.mubr.bf16.mxu0 0
      %729 = vmatmul.mubr.bf16.gmra.mrb[0].mxu0 %v567
      %v730 = vpop.f32.mrb[0].mxu0
      %v731 = vadd.f32 %v590, %v730
      %v732 = vpop.f32.mrb[0].mxu0
      %v733 = vpop.f32.mrb[0].mxu0
      %v734 = vadd.f32 %v590, %v733
      %v735 = vpop.f32.mrb[0].mxu0
      %736 = vdwg.mxu0
      %v737 = vxor.u32 %v675, 2147483648
      %v738 = vxor.u32 %v678, 2147483648
      %v739 = vxor.u32 %v683, 2147483648
      %v740 = vxor.u32 %v686, 2147483648
      %v741 = vxor.u32 %v691, 2147483648
      %v742 = vxor.u32 %v694, 2147483648
      %v743 = vxor.u32 %v699, 2147483648
      %v744 = vxor.u32 %v702, 2147483648
      %v745 = vxor.u32 %v707, 2147483648
      %v746 = vxor.u32 %v710, 2147483648
      %v747 = vxor.u32 %v715, 2147483648
      %v748 = vxor.u32 %v718, 2147483648
      %v749 = vxor.u32 %v723, 2147483648
      %v750 = vxor.u32 %v726, 2147483648
      %v751 = vxor.u32 %v731, 2147483648
      %v752 = vxor.u32 %v734, 2147483648
      %v753 = vmul.f32 %v737, 1.442695
      %v754 = vpow.pop %v753
      %v755 = vmul.f32 %v738, 1.442695
      %v756 = vpow.pop %v755
      %v757 = vmul.f32 %v739, 1.442695
      %v758 = vpow.pop %v757
      %v759 = vmul.f32 %v740, 1.442695
      %v760 = vpow.pop %v759
      %v761 = vmul.f32 %v741, 1.442695
      %v762 = vpow.pop %v761
      %v763 = vmul.f32 %v742, 1.442695
      %v764 = vpow.pop %v763
      %v765 = vmul.f32 %v743, 1.442695
      %v766 = vpow.pop %v765
      %v767 = vmul.f32 %v744, 1.442695
      %v768 = vpow.pop %v767
      %v769 = vmul.f32 %v745, 1.442695
      %v770 = vpow.pop %v769
      %v771 = vmul.f32 %v746, 1.442695
      %v772 = vpow.pop %v771
      %v773 = vmul.f32 %v747, 1.442695
      %v774 = vpow.pop %v773
      %v775 = vmul.f32 %v748, 1.442695
      %v776 = vpow.pop %v775
      %v777 = vmul.f32 %v749, 1.442695
      %v778 = vpow.pop %v777
      %v779 = vmul.f32 %v750, 1.442695
      %v780 = vpow.pop %v779
      %v781 = vmul.f32 %v751, 1.442695
      %v782 = vpow.pop %v781
      %v783 = vmul.f32 %v752, 1.442695
      %v784 = vpow.pop %v783
      %v785 = vadd.f32 %v754, 1.0
      %v786 = vadd.f32 %v756, 1.0
      %v787 = vadd.f32 %v758, 1.0
      %v788 = vadd.f32 %v760, 1.0
      %v789 = vadd.f32 %v762, 1.0
      %v790 = vadd.f32 %v764, 1.0
      %v791 = vadd.f32 %v766, 1.0
      %v792 = vadd.f32 %v768, 1.0
      %v793 = vadd.f32 %v770, 1.0
      %v794 = vadd.f32 %v772, 1.0
      %v795 = vadd.f32 %v774, 1.0
      %v796 = vadd.f32 %v776, 1.0
      %v797 = vadd.f32 %v778, 1.0
      %v798 = vadd.f32 %v780, 1.0
      %v799 = vadd.f32 %v782, 1.0
      %v800 = vadd.f32 %v784, 1.0
      %v801 = vrcp.pop %v785
      %v802 = vmul.f32 1.0, %v801
      %v803 = vrcp.pop %v786
      %v804 = vmul.f32 1.0, %v803
      %v805 = vrcp.pop %v787
      %v806 = vmul.f32 1.0, %v805
      %v807 = vrcp.pop %v788
      %v808 = vmul.f32 1.0, %v807
      %v809 = vrcp.pop %v789
      %v810 = vmul.f32 1.0, %v809
      %v811 = vrcp.pop %v790
      %v812 = vmul.f32 1.0, %v811
      %v813 = vrcp.pop %v791
      %v814 = vmul.f32 1.0, %v813
      %v815 = vrcp.pop %v792
      %v816 = vmul.f32 1.0, %v815
      %v817 = vrcp.pop %v793
      %v818 = vmul.f32 1.0, %v817
      %v819 = vrcp.pop %v794
      %v820 = vmul.f32 1.0, %v819
      %v821 = vrcp.pop %v795
      %v822 = vmul.f32 1.0, %v821
      %v823 = vrcp.pop %v796
      %v824 = vmul.f32 1.0, %v823
      %v825 = vrcp.pop %v797
      %v826 = vmul.f32 1.0, %v825
      %v827 = vrcp.pop %v798
      %v828 = vmul.f32 1.0, %v827
      %v829 = vrcp.pop %v799
      %v830 = vmul.f32 1.0, %v829
      %v831 = vrcp.pop %v800
      %v832 = vmul.f32 1.0, %v831
      %v833 = vmul.f32 %v675, %v802
      %v834 = vmul.f32 %v678, %v804
      %v835 = vmul.f32 %v683, %v806
      %v836 = vmul.f32 %v686, %v808
      %v837 = vmul.f32 %v691, %v810
      %v838 = vmul.f32 %v694, %v812
      %v839 = vmul.f32 %v699, %v814
      %v840 = vmul.f32 %v702, %v816
      %v841 = vmul.f32 %v707, %v818
      %v842 = vmul.f32 %v710, %v820
      %v843 = vmul.f32 %v715, %v822
      %v844 = vmul.f32 %v718, %v824
      %v845 = vmul.f32 %v723, %v826
      %v846 = vmul.f32 %v726, %v828
      %v847 = vmul.f32 %v731, %v830
      %v848 = vmul.f32 %v734, %v832
      %v849 = vpack.c.bf16 %v834, %v833
      %v850 = vpack.c.bf16 %v836, %v835
      %v851 = vpack.c.bf16 %v838, %v837
      %v852 = vpack.c.bf16 %v840, %v839
      %v853 = vpack.c.bf16 %v842, %v841
      %v854 = vpack.c.bf16 %v844, %v843
      %v855 = vpack.c.bf16 %v846, %v845
      %v856 = vpack.c.bf16 %v848, %v847
      %s857 = scalar_lea.vmem %s2, 64
      %v858 = vld [vmem:[%s857] sm:$0xf]
      %v859 = vld [vmem:[%s857 + $0x4] sm:$0xf]
      %v860 = vld [vmem:[%s857 + $0x8] sm:$0xf]
      %v861 = vld [vmem:[%s857 + $0xc] sm:$0xf]
      %v862 = vld [vmem:[%s857 + $0x10] sm:$0xf]
      %v863 = vld [vmem:[%s857 + $0x14] sm:$0xf]
      %v864 = vld [vmem:[%s857 + $0x18] sm:$0xf]
      %v865 = vld [vmem:[%s857 + $0x1c] sm:$0xf]
      %v866 = vld [vmem:[%s857 + $0x20] sm:$0xf]
      %v867 = vld [vmem:[%s857 + $0x24] sm:$0xf]
      %v868 = vld [vmem:[%s857 + $0x28] sm:$0xf]
      %v869 = vld [vmem:[%s857 + $0x2c] sm:$0xf]
      %v870 = vld [vmem:[%s857 + $0x30] sm:$0xf]
      %v871 = vld [vmem:[%s857 + $0x34] sm:$0xf]
      %v872 = vld [vmem:[%s857 + $0x38] sm:$0xf]
      %v873 = vld [vmem:[%s857 + $0x3c] sm:$0xf]
      %s874 = scalar_lea.vmem %s4, 2
      %v875 = vld [vmem:[%s874] sm:$0x1]
      %v877 = vlaneseq
      %v878 = vshrl.u32 %v877, 7
      %v879 = vsub.s32 0, %v878
      %v880 = vrot.slane %v875, %v879
      %v898 = vunpack.c.l.b16 %v858
      %v899 = vunpack.c.l.b16 %v859
      %v900 = vunpack.c.l.b16 %v860
      %v901 = vunpack.c.l.b16 %v861
      %v902 = vunpack.c.l.b16 %v862
      %v903 = vunpack.c.l.b16 %v863
      %v904 = vunpack.c.l.b16 %v864
      %v905 = vunpack.c.l.b16 %v865
      %v906 = vunpack.c.l.b16 %v866
      %v907 = vunpack.c.l.b16 %v867
      %v908 = vunpack.c.l.b16 %v868
      %v909 = vunpack.c.l.b16 %v869
      %v910 = vunpack.c.l.b16 %v870
      %v911 = vunpack.c.l.b16 %v871
      %v912 = vunpack.c.l.b16 %v872
      %v913 = vunpack.c.l.b16 %v873
      %v914 = vpack.c.b16 %v899, %v898
      %v915 = vpack.c.b16 %v901, %v900
      %v916 = vpack.c.b16 %v903, %v902
      %v917 = vpack.c.b16 %v905, %v904
      %v918 = vpack.c.b16 %v907, %v906
      %v919 = vpack.c.b16 %v909, %v908
      %v920 = vpack.c.b16 %v911, %v910
      %v921 = vpack.c.b16 %v913, %v912
      %930 = vmatprep.subr.bf16.mxu0 0
      %931 = vmatpush1.bf16.msra.mxu0 %v914
      %932 = vmatprep.subr.bf16.mxu0 0
      %933 = vmatpush1.bf16.msra.mxu0 %v915
      %934 = vmatprep.subr.bf16.mxu0 0
      %935 = vmatpush1.bf16.msra.mxu0 %v916
      %936 = vmatprep.subr.bf16.mxu0 0
      %937 = vmatpush1.bf16.msra.mxu0 %v917
      %938 = vmatprep.subr.bf16.mxu0 0
      %939 = vmatpush1.bf16.msra.mxu0 %v918
      %940 = vmatprep.subr.bf16.mxu0 0
      %941 = vmatpush1.bf16.msra.mxu0 %v919
      %942 = vmatprep.subr.bf16.mxu0 0
      %943 = vmatpush1.bf16.msra.mxu0 %v920
      %944 = vmatprep.subr.bf16.mxu0 0
      %945 = vmatpush1.bf16.msra.mxu0 %v921
      %946 = vmatprep.subr.bf16.mxu0 0
      %947 = vmatpush1.bf16.msra.mxu0 0
      %948 = vmatprep.subr.bf16.mxu0 0
      %949 = vmatpush1.bf16.msra.mxu0 0
      %950 = vmatprep.subr.bf16.mxu0 0
      %951 = vmatpush1.bf16.msra.mxu0 0
      %952 = vmatprep.subr.bf16.mxu0 0
      %953 = vmatpush1.bf16.msra.mxu0 0
      %954 = vmatprep.subr.bf16.mxu0 0
      %955 = vmatpush1.bf16.msra.mxu0 0
      %956 = vmatprep.subr.bf16.mxu0 0
      %957 = vmatpush1.bf16.msra.mxu0 0
      %958 = vmatprep.subr.bf16.mxu0 0
      %959 = vmatpush1.bf16.msra.mxu0 0
      %960 = vmatprep.subr.bf16.mxu0 0
      %961 = vmatpush1.bf16.msra.mxu0 0
      %962 = vmatprep.mubr.bf16.mxu0 0
      %963 = vmatmul.mubr.bf16.gmra.mrb[0].mxu0 %v849
      %v964 = vpop.f32.mrb[0].mxu0
      %v965 = vadd.f32 %v880, %v964
      %v966 = vpop.f32.mrb[0].mxu0
      %v967 = vpop.f32.mrb[0].mxu0
      %v968 = vadd.f32 %v880, %v967
      %v969 = vpop.f32.mrb[0].mxu0
      %970 = vmatprep.mubr.bf16.mxu0 0
      %971 = vmatmul.mubr.bf16.gmra.mrb[0].mxu0 %v850
      %v972 = vpop.f32.mrb[0].mxu0
      %v973 = vadd.f32 %v880, %v972
      %v974 = vpop.f32.mrb[0].mxu0
      %v975 = vpop.f32.mrb[0].mxu0
      %v976 = vadd.f32 %v880, %v975
      %v977 = vpop.f32.mrb[0].mxu0
      %978 = vmatprep.mubr.bf16.mxu0 0
      %979 = vmatmul.mubr.bf16.gmra.mrb[0].mxu0 %v851
      %v980 = vpop.f32.mrb[0].mxu0
      %v981 = vadd.f32 %v880, %v980
      %v982 = vpop.f32.mrb[0].mxu0
      %v983 = vpop.f32.mrb[0].mxu0
      %v984 = vadd.f32 %v880, %v983
      %v985 = vpop.f32.mrb[0].mxu0
      %986 = vmatprep.mubr.bf16.mxu0 0
      %987 = vmatmul.mubr.bf16.gmra.mrb[0].mxu0 %v852
      %v988 = vpop.f32.mrb[0].mxu0
      %v989 = vadd.f32 %v880, %v988
      %v990 = vpop.f32.mrb[0].mxu0
      %v991 = vpop.f32.mrb[0].mxu0
      %v992 = vadd.f32 %v880, %v991
      %v993 = vpop.f32.mrb[0].mxu0
      %994 = vmatprep.mubr.bf16.mxu0 0
      %995 = vmatmul.mubr.bf16.gmra.mrb[0].mxu0 %v853
      %v996 = vpop.f32.mrb[0].mxu0
      %v997 = vadd.f32 %v880, %v996
      %v998 = vpop.f32.mrb[0].mxu0
      %v999 = vpop.f32.mrb[0].mxu0
      %v1000 = vadd.f32 %v880, %v999
      %v1001 = vpop.f32.mrb[0].mxu0
      %1002 = vmatprep.mubr.bf16.mxu0 0
      %1003 = vmatmul.mubr.bf16.gmra.mrb[0].mxu0 %v854
      %v1004 = vpop.f32.mrb[0].mxu0
      %v1005 = vadd.f32 %v880, %v1004
      %v1006 = vpop.f32.mrb[0].mxu0
      %v1007 = vpop.f32.mrb[0].mxu0
      %v1008 = vadd.f32 %v880, %v1007
      %v1009 = vpop.f32.mrb[0].mxu0
      %1010 = vmatprep.mubr.bf16.mxu0 0
      %1011 = vmatmul.mubr.bf16.gmra.mrb[0].mxu0 %v855
      %v1012 = vpop.f32.mrb[0].mxu0
      %v1013 = vadd.f32 %v880, %v1012
      %v1014 = vpop.f32.mrb[0].mxu0
      %v1015 = vpop.f32.mrb[0].mxu0
      %v1016 = vadd.f32 %v880, %v1015
      %v1017 = vpop.f32.mrb[0].mxu0
      %1018 = vmatprep.mubr.bf16.mxu0 0
      %1019 = vmatmul.mubr.bf16.gmra.mrb[0].mxu0 %v856
      %v1020 = vpop.f32.mrb[0].mxu0
      %v1021 = vadd.f32 %v880, %v1020
      %v1022 = vpop.f32.mrb[0].mxu0
      %v1023 = vpop.f32.mrb[0].mxu0
      %v1024 = vadd.f32 %v880, %v1023
      %v1025 = vpop.f32.mrb[0].mxu0
      %1026 = vdwg.mxu0
      %v1027 = vxor.u32 %v965, 2147483648
      %v1028 = vxor.u32 %v968, 2147483648
      %v1029 = vxor.u32 %v973, 2147483648
      %v1030 = vxor.u32 %v976, 2147483648
      %v1031 = vxor.u32 %v981, 2147483648
      %v1032 = vxor.u32 %v984, 2147483648
      %v1033 = vxor.u32 %v989, 2147483648
      %v1034 = vxor.u32 %v992, 2147483648
      %v1035 = vxor.u32 %v997, 2147483648
      %v1036 = vxor.u32 %v1000, 2147483648
      %v1037 = vxor.u32 %v1005, 2147483648
      %v1038 = vxor.u32 %v1008, 2147483648
      %v1039 = vxor.u32 %v1013, 2147483648
      %v1040 = vxor.u32 %v1016, 2147483648
      %v1041 = vxor.u32 %v1021, 2147483648
      %v1042 = vxor.u32 %v1024, 2147483648
      %v1043 = vmul.f32 %v1027, 1.442695
      %v1044 = vpow.pop %v1043
      %v1045 = vmul.f32 %v1028, 1.442695
      %v1046 = vpow.pop %v1045
      %v1047 = vmul.f32 %v1029, 1.442695
      %v1048 = vpow.pop %v1047
      %v1049 = vmul.f32 %v1030, 1.442695
      %v1050 = vpow.pop %v1049
      %v1051 = vmul.f32 %v1031, 1.442695
      %v1052 = vpow.pop %v1051
      %v1053 = vmul.f32 %v1032, 1.442695
      %v1054 = vpow.pop %v1053
      %v1055 = vmul.f32 %v1033, 1.442695
      %v1056 = vpow.pop %v1055
      %v1057 = vmul.f32 %v1034, 1.442695
      %v1058 = vpow.pop %v1057
      %v1059 = vmul.f32 %v1035, 1.442695
      %v1060 = vpow.pop %v1059
      %v1061 = vmul.f32 %v1036, 1.442695
      %v1062 = vpow.pop %v1061
      %v1063 = vmul.f32 %v1037, 1.442695
      %v1064 = vpow.pop %v1063
      %v1065 = vmul.f32 %v1038, 1.442695
      %v1066 = vpow.pop %v1065
      %v1067 = vmul.f32 %v1039, 1.442695
      %v1068 = vpow.pop %v1067
      %v1069 = vmul.f32 %v1040, 1.442695
      %v1070 = vpow.pop %v1069
      %v1071 = vmul.f32 %v1041, 1.442695
      %v1072 = vpow.pop %v1071
      %v1073 = vmul.f32 %v1042, 1.442695
      %v1074 = vpow.pop %v1073
      %v1075 = vadd.f32 %v1044, 1.0
      %v1076 = vadd.f32 %v1046, 1.0
      %v1077 = vadd.f32 %v1048, 1.0
      %v1078 = vadd.f32 %v1050, 1.0
      %v1079 = vadd.f32 %v1052, 1.0
      %v1080 = vadd.f32 %v1054, 1.0
      %v1081 = vadd.f32 %v1056, 1.0
      %v1082 = vadd.f32 %v1058, 1.0
      %v1083 = vadd.f32 %v1060, 1.0
      %v1084 = vadd.f32 %v1062, 1.0
      %v1085 = vadd.f32 %v1064, 1.0
      %v1086 = vadd.f32 %v1066, 1.0
      %v1087 = vadd.f32 %v1068, 1.0
      %v1088 = vadd.f32 %v1070, 1.0
      %v1089 = vadd.f32 %v1072, 1.0
      %v1090 = vadd.f32 %v1074, 1.0
      %v1091 = vrcp.pop %v1075
      %v1092 = vmul.f32 1.0, %v1091
      %v1093 = vrcp.pop %v1076
      %v1094 = vmul.f32 1.0, %v1093
      %v1095 = vrcp.pop %v1077
      %v1096 = vmul.f32 1.0, %v1095
      %v1097 = vrcp.pop %v1078
      %v1098 = vmul.f32 1.0, %v1097
      %v1099 = vrcp.pop %v1079
      %v1100 = vmul.f32 1.0, %v1099
      %v1101 = vrcp.pop %v1080
      %v1102 = vmul.f32 1.0, %v1101
      %v1103 = vrcp.pop %v1081
      %v1104 = vmul.f32 1.0, %v1103
      %v1105 = vrcp.pop %v1082
      %v1106 = vmul.f32 1.0, %v1105
      %v1107 = vrcp.pop %v1083
      %v1108 = vmul.f32 1.0, %v1107
      %v1109 = vrcp.pop %v1084
      %v1110 = vmul.f32 1.0, %v1109
      %v1111 = vrcp.pop %v1085
      %v1112 = vmul.f32 1.0, %v1111
      %v1113 = vrcp.pop %v1086
      %v1114 = vmul.f32 1.0, %v1113
      %v1115 = vrcp.pop %v1087
      %v1116 = vmul.f32 1.0, %v1115
      %v1117 = vrcp.pop %v1088
      %v1118 = vmul.f32 1.0, %v1117
      %v1119 = vrcp.pop %v1089
      %v1120 = vmul.f32 1.0, %v1119
      %v1121 = vrcp.pop %v1090
      %v1122 = vmul.f32 1.0, %v1121
      %v1123 = vmul.f32 %v965, %v1092
      %v1124 = vmul.f32 %v968, %v1094
      %v1125 = vmul.f32 %v973, %v1096
      %v1126 = vmul.f32 %v976, %v1098
      %v1127 = vmul.f32 %v981, %v1100
      %v1128 = vmul.f32 %v984, %v1102
      %v1129 = vmul.f32 %v989, %v1104
      %v1130 = vmul.f32 %v992, %v1106
      %v1131 = vmul.f32 %v997, %v1108
      %v1132 = vmul.f32 %v1000, %v1110
      %v1133 = vmul.f32 %v1005, %v1112
      %v1134 = vmul.f32 %v1008, %v1114
      %v1135 = vmul.f32 %v1013, %v1116
      %v1136 = vmul.f32 %v1016, %v1118
      %v1137 = vmul.f32 %v1021, %v1120
      %v1138 = vmul.f32 %v1024, %v1122
      %v1139 = vpack.c.bf16 %v1124, %v1123
      %v1140 = vpack.c.bf16 %v1126, %v1125
      %v1141 = vpack.c.bf16 %v1128, %v1127
      %v1142 = vpack.c.bf16 %v1130, %v1129
      %v1143 = vpack.c.bf16 %v1132, %v1131
      %v1144 = vpack.c.bf16 %v1134, %v1133
      %v1145 = vpack.c.bf16 %v1136, %v1135
      %v1146 = vpack.c.bf16 %v1138, %v1137
      %s1147 = scalar_lea.vmem %s2, 128
      %v1148 = vld [vmem:[%s1147] sm:$0xf]
      %v1149 = vld [vmem:[%s1147 + $0x4] sm:$0xf]
      %v1150 = vld [vmem:[%s1147 + $0x8] sm:$0xf]
      %v1151 = vld [vmem:[%s1147 + $0xc] sm:$0xf]
      %v1152 = vld [vmem:[%s1147 + $0x10] sm:$0xf]
      %v1153 = vld [vmem:[%s1147 + $0x14] sm:$0xf]
      %v1154 = vld [vmem:[%s1147 + $0x18] sm:$0xf]
      %v1155 = vld [vmem:[%s1147 + $0x1c] sm:$0xf]
      %v1156 = vld [vmem:[%s1147 + $0x20] sm:$0xf]
      %v1157 = vld [vmem:[%s1147 + $0x24] sm:$0xf]
      %v1158 = vld [vmem:[%s1147 + $0x28] sm:$0xf]
      %v1159 = vld [vmem:[%s1147 + $0x2c] sm:$0xf]
      %v1160 = vld [vmem:[%s1147 + $0x30] sm:$0xf]
      %v1161 = vld [vmem:[%s1147 + $0x34] sm:$0xf]
      %v1162 = vld [vmem:[%s1147 + $0x38] sm:$0xf]
      %v1163 = vld [vmem:[%s1147 + $0x3c] sm:$0xf]
      %s1164 = scalar_lea.vmem %s4, 3
      %v1165 = vld [vmem:[%s1164] sm:$0x1]
      %v1167 = vlaneseq
      %v1168 = vshrl.u32 %v1167, 7
      %v1169 = vsub.s32 0, %v1168
      %v1170 = vrot.slane %v1165, %v1169
      %v1188 = vunpack.c.l.b16 %v1148
      %v1189 = vunpack.c.l.b16 %v1149
      %v1190 = vunpack.c.l.b16 %v1150
      %v1191 = vunpack.c.l.b16 %v1151
      %v1192 = vunpack.c.l.b16 %v1152
      %v1193 = vunpack.c.l.b16 %v1153
      %v1194 = vunpack.c.l.b16 %v1154
      %v1195 = vunpack.c.l.b16 %v1155
      %v1196 = vunpack.c.l.b16 %v1156
      %v1197 = vunpack.c.l.b16 %v1157
      %v1198 = vunpack.c.l.b16 %v1158
      %v1199 = vunpack.c.l.b16 %v1159
      %v1200 = vunpack.c.l.b16 %v1160
      %v1201 = vunpack.c.l.b16 %v1161
      %v1202 = vunpack.c.l.b16 %v1162
      %v1203 = vunpack.c.l.b16 %v1163
      %v1204 = vpack.c.b16 %v1189, %v1188
      %v1205 = vpack.c.b16 %v1191, %v1190
      %v1206 = vpack.c.b16 %v1193, %v1192
      %v1207 = vpack.c.b16 %v1195, %v1194
      %v1208 = vpack.c.b16 %v1197, %v1196
      %v1209 = vpack.c.b16 %v1199, %v1198
      %v1210 = vpack.c.b16 %v1201, %v1200
      %v1211 = vpack.c.b16 %v1203, %v1202
      %1220 = vmatprep.subr.bf16.mxu0 0
      %1221 = vmatpush1.bf16.msra.mxu0 %v1204
      %1222 = vmatprep.subr.bf16.mxu0 0
      %1223 = vmatpush1.bf16.msra.mxu0 %v1205
      %1224 = vmatprep.subr.bf16.mxu0 0
      %1225 = vmatpush1.bf16.msra.mxu0 %v1206
      %1226 = vmatprep.subr.bf16.mxu0 0
      %1227 = vmatpush1.bf16.msra.mxu0 %v1207
      %1228 = vmatprep.subr.bf16.mxu0 0
      %1229 = vmatpush1.bf16.msra.mxu0 %v1208
      %1230 = vmatprep.subr.bf16.mxu0 0
      %1231 = vmatpush1.bf16.msra.mxu0 %v1209
      %1232 = vmatprep.subr.bf16.mxu0 0
      %1233 = vmatpush1.bf16.msra.mxu0 %v1210
      %1234 = vmatprep.subr.bf16.mxu0 0
      %1235 = vmatpush1.bf16.msra.mxu0 %v1211
      %1236 = vmatprep.subr.bf16.mxu0 0
      %1237 = vmatpush1.bf16.msra.mxu0 0
      %1238 = vmatprep.subr.bf16.mxu0 0
      %1239 = vmatpush1.bf16.msra.mxu0 0
      %1240 = vmatprep.subr.bf16.mxu0 0
      %1241 = vmatpush1.bf16.msra.mxu0 0
      %1242 = vmatprep.subr.bf16.mxu0 0
      %1243 = vmatpush1.bf16.msra.mxu0 0
      %1244 = vmatprep.subr.bf16.mxu0 0
      %1245 = vmatpush1.bf16.msra.mxu0 0
      %1246 = vmatprep.subr.bf16.mxu0 0
      %1247 = vmatpush1.bf16.msra.mxu0 0
      %1248 = vmatprep.subr.bf16.mxu0 0
      %1249 = vmatpush1.bf16.msra.mxu0 0
      %1250 = vmatprep.subr.bf16.mxu0 0
      %1251 = vmatpush1.bf16.msra.mxu0 0
      %1252 = vmatprep.mubr.bf16.mxu0 0
      %1253 = vmatmul.mubr.bf16.gmra.mrb[0].mxu0 %v1139
      %v1254 = vpop.f32.mrb[0].mxu0
      %v1255 = vadd.f32 %v1170, %v1254
      %v1256 = vpop.f32.mrb[0].mxu0
      %v1257 = vpop.f32.mrb[0].mxu0
      %v1258 = vadd.f32 %v1170, %v1257
      %v1259 = vpop.f32.mrb[0].mxu0
      %1260 = vmatprep.mubr.bf16.mxu0 0
      %1261 = vmatmul.mubr.bf16.gmra.mrb[0].mxu0 %v1140
      %v1262 = vpop.f32.mrb[0].mxu0
      %v1263 = vadd.f32 %v1170, %v1262
      %v1264 = vpop.f32.mrb[0].mxu0
      %v1265 = vpop.f32.mrb[0].mxu0
      %v1266 = vadd.f32 %v1170, %v1265
      %v1267 = vpop.f32.mrb[0].mxu0
      %1268 = vmatprep.mubr.bf16.mxu0 0
      %1269 = vmatmul.mubr.bf16.gmra.mrb[0].mxu0 %v1141
      %v1270 = vpop.f32.mrb[0].mxu0
      %v1271 = vadd.f32 %v1170, %v1270
      %v1272 = vpop.f32.mrb[0].mxu0
      %v1273 = vpop.f32.mrb[0].mxu0
      %v1274 = vadd.f32 %v1170, %v1273
      %v1275 = vpop.f32.mrb[0].mxu0
      %1276 = vmatprep.mubr.bf16.mxu0 0
      %1277 = vmatmul.mubr.bf16.gmra.mrb[0].mxu0 %v1142
      %v1278 = vpop.f32.mrb[0].mxu0
      %v1279 = vadd.f32 %v1170, %v1278
      %v1280 = vpop.f32.mrb[0].mxu0
      %v1281 = vpop.f32.mrb[0].mxu0
      %v1282 = vadd.f32 %v1170, %v1281
      %v1283 = vpop.f32.mrb[0].mxu0
      %1284 = vmatprep.mubr.bf16.mxu0 0
      %1285 = vmatmul.mubr.bf16.gmra.mrb[0].mxu0 %v1143
      %v1286 = vpop.f32.mrb[0].mxu0
      %v1287 = vadd.f32 %v1170, %v1286
      %v1288 = vpop.f32.mrb[0].mxu0
      %v1289 = vpop.f32.mrb[0].mxu0
      %v1290 = vadd.f32 %v1170, %v1289
      %v1291 = vpop.f32.mrb[0].mxu0
      %1292 = vmatprep.mubr.bf16.mxu0 0
      %1293 = vmatmul.mubr.bf16.gmra.mrb[0].mxu0 %v1144
      %v1294 = vpop.f32.mrb[0].mxu0
      %v1295 = vadd.f32 %v1170, %v1294
      %v1296 = vpop.f32.mrb[0].mxu0
      %v1297 = vpop.f32.mrb[0].mxu0
      %v1298 = vadd.f32 %v1170, %v1297
      %v1299 = vpop.f32.mrb[0].mxu0
      %1300 = vmatprep.mubr.bf16.mxu0 0
      %1301 = vmatmul.mubr.bf16.gmra.mrb[0].mxu0 %v1145
      %v1302 = vpop.f32.mrb[0].mxu0
      %v1303 = vadd.f32 %v1170, %v1302
      %v1304 = vpop.f32.mrb[0].mxu0
      %v1305 = vpop.f32.mrb[0].mxu0
      %v1306 = vadd.f32 %v1170, %v1305
      %v1307 = vpop.f32.mrb[0].mxu0
      %1308 = vmatprep.mubr.bf16.mxu0 0
      %1309 = vmatmul.mubr.bf16.gmra.mrb[0].mxu0 %v1146
      %v1310 = vpop.f32.mrb[0].mxu0
      %v1311 = vadd.f32 %v1170, %v1310
      %v1312 = vpop.f32.mrb[0].mxu0
      %v1313 = vpop.f32.mrb[0].mxu0
      %v1314 = vadd.f32 %v1170, %v1313
      %v1315 = vpop.f32.mrb[0].mxu0
      %1316 = vdwg.mxu0
      %v1317 = vxor.u32 %v1255, 2147483648
      %v1318 = vxor.u32 %v1258, 2147483648
      %v1319 = vxor.u32 %v1263, 2147483648
      %v1320 = vxor.u32 %v1266, 2147483648
      %v1321 = vxor.u32 %v1271, 2147483648
      %v1322 = vxor.u32 %v1274, 2147483648
      %v1323 = vxor.u32 %v1279, 2147483648
      %v1324 = vxor.u32 %v1282, 2147483648
      %v1325 = vxor.u32 %v1287, 2147483648
      %v1326 = vxor.u32 %v1290, 2147483648
      %v1327 = vxor.u32 %v1295, 2147483648
      %v1328 = vxor.u32 %v1298, 2147483648
      %v1329 = vxor.u32 %v1303, 2147483648
      %v1330 = vxor.u32 %v1306, 2147483648
      %v1331 = vxor.u32 %v1311, 2147483648
      %v1332 = vxor.u32 %v1314, 2147483648
      %v1333 = vmul.f32 %v1317, 1.442695
      %v1334 = vpow.pop %v1333
      %v1335 = vmul.f32 %v1318, 1.442695
      %v1336 = vpow.pop %v1335
      %v1337 = vmul.f32 %v1319, 1.442695
      %v1338 = vpow.pop %v1337
      %v1339 = vmul.f32 %v1320, 1.442695
      %v1340 = vpow.pop %v1339
      %v1341 = vmul.f32 %v1321, 1.442695
      %v1342 = vpow.pop %v1341
      %v1343 = vmul.f32 %v1322, 1.442695
      %v1344 = vpow.pop %v1343
      %v1345 = vmul.f32 %v1323, 1.442695
      %v1346 = vpow.pop %v1345
      %v1347 = vmul.f32 %v1324, 1.442695
      %v1348 = vpow.pop %v1347
      %v1349 = vmul.f32 %v1325, 1.442695
      %v1350 = vpow.pop %v1349
      %v1351 = vmul.f32 %v1326, 1.442695
      %v1352 = vpow.pop %v1351
      %v1353 = vmul.f32 %v1327, 1.442695
      %v1354 = vpow.pop %v1353
      %v1355 = vmul.f32 %v1328, 1.442695
      %v1356 = vpow.pop %v1355
      %v1357 = vmul.f32 %v1329, 1.442695
      %v1358 = vpow.pop %v1357
      %v1359 = vmul.f32 %v1330, 1.442695
      %v1360 = vpow.pop %v1359
      %v1361 = vmul.f32 %v1331, 1.442695
      %v1362 = vpow.pop %v1361
      %v1363 = vmul.f32 %v1332, 1.442695
      %v1364 = vpow.pop %v1363
      %v1365 = vadd.f32 %v1334, 1.0
      %v1366 = vadd.f32 %v1336, 1.0
      %v1367 = vadd.f32 %v1338, 1.0
      %v1368 = vadd.f32 %v1340, 1.0
      %v1369 = vadd.f32 %v1342, 1.0
      %v1370 = vadd.f32 %v1344, 1.0
      %v1371 = vadd.f32 %v1346, 1.0
      %v1372 = vadd.f32 %v1348, 1.0
      %v1373 = vadd.f32 %v1350, 1.0
      %v1374 = vadd.f32 %v1352, 1.0
      %v1375 = vadd.f32 %v1354, 1.0
      %v1376 = vadd.f32 %v1356, 1.0
      %v1377 = vadd.f32 %v1358, 1.0
      %v1378 = vadd.f32 %v1360, 1.0
      %v1379 = vadd.f32 %v1362, 1.0
      %v1380 = vadd.f32 %v1364, 1.0
      %v1381 = vrcp.pop %v1365
      %v1382 = vmul.f32 1.0, %v1381
      %v1383 = vrcp.pop %v1366
      %v1384 = vmul.f32 1.0, %v1383
      %v1385 = vrcp.pop %v1367
      %v1386 = vmul.f32 1.0, %v1385
      %v1387 = vrcp.pop %v1368
      %v1388 = vmul.f32 1.0, %v1387
      %v1389 = vrcp.pop %v1369
      %v1390 = vmul.f32 1.0, %v1389
      %v1391 = vrcp.pop %v1370
      %v1392 = vmul.f32 1.0, %v1391
      %v1393 = vrcp.pop %v1371
      %v1394 = vmul.f32 1.0, %v1393
      %v1395 = vrcp.pop %v1372
      %v1396 = vmul.f32 1.0, %v1395
      %v1397 = vrcp.pop %v1373
      %v1398 = vmul.f32 1.0, %v1397
      %v1399 = vrcp.pop %v1374
      %v1400 = vmul.f32 1.0, %v1399
      %v1401 = vrcp.pop %v1375
      %v1402 = vmul.f32 1.0, %v1401
      %v1403 = vrcp.pop %v1376
      %v1404 = vmul.f32 1.0, %v1403
      %v1405 = vrcp.pop %v1377
      %v1406 = vmul.f32 1.0, %v1405
      %v1407 = vrcp.pop %v1378
      %v1408 = vmul.f32 1.0, %v1407
      %v1409 = vrcp.pop %v1379
      %v1410 = vmul.f32 1.0, %v1409
      %v1411 = vrcp.pop %v1380
      %v1412 = vmul.f32 1.0, %v1411
      %v1413 = vmul.f32 %v1255, %v1382
      %v1414 = vmul.f32 %v1258, %v1384
      %v1415 = vmul.f32 %v1263, %v1386
      %v1416 = vmul.f32 %v1266, %v1388
      %v1417 = vmul.f32 %v1271, %v1390
      %v1418 = vmul.f32 %v1274, %v1392
      %v1419 = vmul.f32 %v1279, %v1394
      %v1420 = vmul.f32 %v1282, %v1396
      %v1421 = vmul.f32 %v1287, %v1398
      %v1422 = vmul.f32 %v1290, %v1400
      %v1423 = vmul.f32 %v1295, %v1402
      %v1424 = vmul.f32 %v1298, %v1404
      %v1425 = vmul.f32 %v1303, %v1406
      %v1426 = vmul.f32 %v1306, %v1408
      %v1427 = vmul.f32 %v1311, %v1410
      %v1428 = vmul.f32 %v1314, %v1412
      %v1429 = vpack.c.bf16 %v1414, %v1413
      %v1430 = vpack.c.bf16 %v1416, %v1415
      %v1431 = vpack.c.bf16 %v1418, %v1417
      %v1432 = vpack.c.bf16 %v1420, %v1419
      %v1433 = vpack.c.bf16 %v1422, %v1421
      %v1434 = vpack.c.bf16 %v1424, %v1423
      %v1435 = vpack.c.bf16 %v1426, %v1425
      %v1436 = vpack.c.bf16 %v1428, %v1427
      %s1437 = scalar_lea.vmem %s2, 192
      %v1438 = vld [vmem:[%s1437] sm:$0xf]
      %v1439 = vld [vmem:[%s1437 + $0x4] sm:$0xf]
      %v1440 = vld [vmem:[%s1437 + $0x8] sm:$0xf]
      %v1441 = vld [vmem:[%s1437 + $0xc] sm:$0xf]
      %v1442 = vld [vmem:[%s1437 + $0x10] sm:$0xf]
      %v1443 = vld [vmem:[%s1437 + $0x14] sm:$0xf]
      %v1444 = vld [vmem:[%s1437 + $0x18] sm:$0xf]
      %v1445 = vld [vmem:[%s1437 + $0x1c] sm:$0xf]
      %v1446 = vld [vmem:[%s1437 + $0x20] sm:$0xf]
      %v1447 = vld [vmem:[%s1437 + $0x24] sm:$0xf]
      %v1448 = vld [vmem:[%s1437 + $0x28] sm:$0xf]
      %v1449 = vld [vmem:[%s1437 + $0x2c] sm:$0xf]
      %v1450 = vld [vmem:[%s1437 + $0x30] sm:$0xf]
      %v1451 = vld [vmem:[%s1437 + $0x34] sm:$0xf]
      %v1452 = vld [vmem:[%s1437 + $0x38] sm:$0xf]
      %v1453 = vld [vmem:[%s1437 + $0x3c] sm:$0xf]
      %s1454 = scalar_lea.vmem %s4, 4
      %v1455 = vld [vmem:[%s1454] sm:$0x1]
      %v1457 = vlaneseq
      %v1458 = vshrl.u32 %v1457, 7
      %v1459 = vsub.s32 0, %v1458
      %v1460 = vrot.slane %v1455, %v1459
      %v1478 = vunpack.c.l.b16 %v1438
      %v1479 = vunpack.c.l.b16 %v1439
      %v1480 = vunpack.c.l.b16 %v1440
      %v1481 = vunpack.c.l.b16 %v1441
      %v1482 = vunpack.c.l.b16 %v1442
      %v1483 = vunpack.c.l.b16 %v1443
      %v1484 = vunpack.c.l.b16 %v1444
      %v1485 = vunpack.c.l.b16 %v1445
      %v1486 = vunpack.c.l.b16 %v1446
      %v1487 = vunpack.c.l.b16 %v1447
      %v1488 = vunpack.c.l.b16 %v1448
      %v1489 = vunpack.c.l.b16 %v1449
      %v1490 = vunpack.c.l.b16 %v1450
      %v1491 = vunpack.c.l.b16 %v1451
      %v1492 = vunpack.c.l.b16 %v1452
      %v1493 = vunpack.c.l.b16 %v1453
      %v1494 = vpack.c.b16 %v1479, %v1478
      %v1495 = vpack.c.b16 %v1481, %v1480
      %v1496 = vpack.c.b16 %v1483, %v1482
      %v1497 = vpack.c.b16 %v1485, %v1484
      %v1498 = vpack.c.b16 %v1487, %v1486
      %v1499 = vpack.c.b16 %v1489, %v1488
      %v1500 = vpack.c.b16 %v1491, %v1490
      %v1501 = vpack.c.b16 %v1493, %v1492
      %1510 = vmatprep.subr.bf16.mxu0 0
      %1511 = vmatpush1.bf16.msra.mxu0 %v1494
      %1512 = vmatprep.subr.bf16.mxu0 0
      %1513 = vmatpush1.bf16.msra.mxu0 %v1495
      %1514 = vmatprep.subr.bf16.mxu0 0
      %1515 = vmatpush1.bf16.msra.mxu0 %v1496
      %1516 = vmatprep.subr.bf16.mxu0 0
      %1517 = vmatpush1.bf16.msra.mxu0 %v1497
      %1518 = vmatprep.subr.bf16.mxu0 0
      %1519 = vmatpush1.bf16.msra.mxu0 %v1498
      %1520 = vmatprep.subr.bf16.mxu0 0
      %1521 = vmatpush1.bf16.msra.mxu0 %v1499
      %1522 = vmatprep.subr.bf16.mxu0 0
      %1523 = vmatpush1.bf16.msra.mxu0 %v1500
      %1524 = vmatprep.subr.bf16.mxu0 0
      %1525 = vmatpush1.bf16.msra.mxu0 %v1501
      %1526 = vmatprep.subr.bf16.mxu0 0
      %1527 = vmatpush1.bf16.msra.mxu0 0
      %1528 = vmatprep.subr.bf16.mxu0 0
      %1529 = vmatpush1.bf16.msra.mxu0 0
      %1530 = vmatprep.subr.bf16.mxu0 0
      %1531 = vmatpush1.bf16.msra.mxu0 0
      %1532 = vmatprep.subr.bf16.mxu0 0
      %1533 = vmatpush1.bf16.msra.mxu0 0
      %1534 = vmatprep.subr.bf16.mxu0 0
      %1535 = vmatpush1.bf16.msra.mxu0 0
      %1536 = vmatprep.subr.bf16.mxu0 0
      %1537 = vmatpush1.bf16.msra.mxu0 0
      %1538 = vmatprep.subr.bf16.mxu0 0
      %1539 = vmatpush1.bf16.msra.mxu0 0
      %1540 = vmatprep.subr.bf16.mxu0 0
      %1541 = vmatpush1.bf16.msra.mxu0 0
      %1542 = vmatprep.mubr.bf16.mxu0 0
      %1543 = vmatmul.mubr.bf16.gmra.mrb[0].mxu0 %v1429
      %v1544 = vpop.f32.mrb[0].mxu0
      %v1545 = vadd.f32 %v1460, %v1544
      %v1546 = vpop.f32.mrb[0].mxu0
      %v1547 = vpop.f32.mrb[0].mxu0
      %v1548 = vadd.f32 %v1460, %v1547
      %v1549 = vpop.f32.mrb[0].mxu0
      %1550 = vmatprep.mubr.bf16.mxu0 0
      %1551 = vmatmul.mubr.bf16.gmra.mrb[0].mxu0 %v1430
      %v1552 = vpop.f32.mrb[0].mxu0
      %v1553 = vadd.f32 %v1460, %v1552
      %v1554 = vpop.f32.mrb[0].mxu0
      %v1555 = vpop.f32.mrb[0].mxu0
      %v1556 = vadd.f32 %v1460, %v1555
      %v1557 = vpop.f32.mrb[0].mxu0
      %1558 = vmatprep.mubr.bf16.mxu0 0
      %1559 = vmatmul.mubr.bf16.gmra.mrb[0].mxu0 %v1431
      %v1560 = vpop.f32.mrb[0].mxu0
      %v1561 = vadd.f32 %v1460, %v1560
      %v1562 = vpop.f32.mrb[0].mxu0
      %v1563 = vpop.f32.mrb[0].mxu0
      %v1564 = vadd.f32 %v1460, %v1563
      %v1565 = vpop.f32.mrb[0].mxu0
      %1566 = vmatprep.mubr.bf16.mxu0 0
      %1567 = vmatmul.mubr.bf16.gmra.mrb[0].mxu0 %v1432
      %v1568 = vpop.f32.mrb[0].mxu0
      %v1569 = vadd.f32 %v1460, %v1568
      %v1570 = vpop.f32.mrb[0].mxu0
      %v1571 = vpop.f32.mrb[0].mxu0
      %v1572 = vadd.f32 %v1460, %v1571
      %v1573 = vpop.f32.mrb[0].mxu0
      %1574 = vmatprep.mubr.bf16.mxu0 0
      %1575 = vmatmul.mubr.bf16.gmra.mrb[0].mxu0 %v1433
      %v1576 = vpop.f32.mrb[0].mxu0
      %v1577 = vadd.f32 %v1460, %v1576
      %v1578 = vpop.f32.mrb[0].mxu0
      %v1579 = vpop.f32.mrb[0].mxu0
      %v1580 = vadd.f32 %v1460, %v1579
      %v1581 = vpop.f32.mrb[0].mxu0
      %1582 = vmatprep.mubr.bf16.mxu0 0
      %1583 = vmatmul.mubr.bf16.gmra.mrb[0].mxu0 %v1434
      %v1584 = vpop.f32.mrb[0].mxu0
      %v1585 = vadd.f32 %v1460, %v1584
      %v1586 = vpop.f32.mrb[0].mxu0
      %v1587 = vpop.f32.mrb[0].mxu0
      %v1588 = vadd.f32 %v1460, %v1587
      %v1589 = vpop.f32.mrb[0].mxu0
      %1590 = vmatprep.mubr.bf16.mxu0 0
      %1591 = vmatmul.mubr.bf16.gmra.mrb[0].mxu0 %v1435
      %v1592 = vpop.f32.mrb[0].mxu0
      %v1593 = vadd.f32 %v1460, %v1592
      %v1594 = vpop.f32.mrb[0].mxu0
      %v1595 = vpop.f32.mrb[0].mxu0
      %v1596 = vadd.f32 %v1460, %v1595
      %v1597 = vpop.f32.mrb[0].mxu0
      %1598 = vmatprep.mubr.bf16.mxu0 0
      %1599 = vmatmul.mubr.bf16.gmra.mrb[0].mxu0 %v1436
      %v1600 = vpop.f32.mrb[0].mxu0
      %v1601 = vadd.f32 %v1460, %v1600
      %v1602 = vpop.f32.mrb[0].mxu0
      %v1603 = vpop.f32.mrb[0].mxu0
      %v1604 = vadd.f32 %v1460, %v1603
      %v1605 = vpop.f32.mrb[0].mxu0
      %1606 = vdwg.mxu0
      %v1607 = vxor.u32 %v1545, 2147483648
      %v1608 = vxor.u32 %v1548, 2147483648
      %v1609 = vxor.u32 %v1553, 2147483648
      %v1610 = vxor.u32 %v1556, 2147483648
      %v1611 = vxor.u32 %v1561, 2147483648
      %v1612 = vxor.u32 %v1564, 2147483648
      %v1613 = vxor.u32 %v1569, 2147483648
      %v1614 = vxor.u32 %v1572, 2147483648
      %v1615 = vxor.u32 %v1577, 2147483648
      %v1616 = vxor.u32 %v1580, 2147483648
      %v1617 = vxor.u32 %v1585, 2147483648
      %v1618 = vxor.u32 %v1588, 2147483648
      %v1619 = vxor.u32 %v1593, 2147483648
      %v1620 = vxor.u32 %v1596, 2147483648
      %v1621 = vxor.u32 %v1601, 2147483648
      %v1622 = vxor.u32 %v1604, 2147483648
      %v1623 = vmul.f32 %v1607, 1.442695
      %v1624 = vpow.pop %v1623
      %v1625 = vmul.f32 %v1608, 1.442695
      %v1626 = vpow.pop %v1625
      %v1627 = vmul.f32 %v1609, 1.442695
      %v1628 = vpow.pop %v1627
      %v1629 = vmul.f32 %v1610, 1.442695
      %v1630 = vpow.pop %v1629
      %v1631 = vmul.f32 %v1611, 1.442695
      %v1632 = vpow.pop %v1631
      %v1633 = vmul.f32 %v1612, 1.442695
      %v1634 = vpow.pop %v1633
      %v1635 = vmul.f32 %v1613, 1.442695
      %v1636 = vpow.pop %v1635
      %v1637 = vmul.f32 %v1614, 1.442695
      %v1638 = vpow.pop %v1637
      %v1639 = vmul.f32 %v1615, 1.442695
      %v1640 = vpow.pop %v1639
      %v1641 = vmul.f32 %v1616, 1.442695
      %v1642 = vpow.pop %v1641
      %v1643 = vmul.f32 %v1617, 1.442695
      %v1644 = vpow.pop %v1643
      %v1645 = vmul.f32 %v1618, 1.442695
      %v1646 = vpow.pop %v1645
      %v1647 = vmul.f32 %v1619, 1.442695
      %v1648 = vpow.pop %v1647
      %v1649 = vmul.f32 %v1620, 1.442695
      %v1650 = vpow.pop %v1649
      %v1651 = vmul.f32 %v1621, 1.442695
      %v1652 = vpow.pop %v1651
      %v1653 = vmul.f32 %v1622, 1.442695
      %v1654 = vpow.pop %v1653
      %v1655 = vadd.f32 %v1624, 1.0
      %v1656 = vadd.f32 %v1626, 1.0
      %v1657 = vadd.f32 %v1628, 1.0
      %v1658 = vadd.f32 %v1630, 1.0
      %v1659 = vadd.f32 %v1632, 1.0
      %v1660 = vadd.f32 %v1634, 1.0
      %v1661 = vadd.f32 %v1636, 1.0
      %v1662 = vadd.f32 %v1638, 1.0
      %v1663 = vadd.f32 %v1640, 1.0
      %v1664 = vadd.f32 %v1642, 1.0
      %v1665 = vadd.f32 %v1644, 1.0
      %v1666 = vadd.f32 %v1646, 1.0
      %v1667 = vadd.f32 %v1648, 1.0
      %v1668 = vadd.f32 %v1650, 1.0
      %v1669 = vadd.f32 %v1652, 1.0
      %v1670 = vadd.f32 %v1654, 1.0
      %v1671 = vrcp.pop %v1655
      %v1672 = vmul.f32 1.0, %v1671
      %v1673 = vrcp.pop %v1656
      %v1674 = vmul.f32 1.0, %v1673
      %v1675 = vrcp.pop %v1657
      %v1676 = vmul.f32 1.0, %v1675
      %v1677 = vrcp.pop %v1658
      %v1678 = vmul.f32 1.0, %v1677
      %v1679 = vrcp.pop %v1659
      %v1680 = vmul.f32 1.0, %v1679
      %v1681 = vrcp.pop %v1660
      %v1682 = vmul.f32 1.0, %v1681
      %v1683 = vrcp.pop %v1661
      %v1684 = vmul.f32 1.0, %v1683
      %v1685 = vrcp.pop %v1662
      %v1686 = vmul.f32 1.0, %v1685
      %v1687 = vrcp.pop %v1663
      %v1688 = vmul.f32 1.0, %v1687
      %v1689 = vrcp.pop %v1664
      %v1690 = vmul.f32 1.0, %v1689
      %v1691 = vrcp.pop %v1665
      %v1692 = vmul.f32 1.0, %v1691
      %v1693 = vrcp.pop %v1666
      %v1694 = vmul.f32 1.0, %v1693
      %v1695 = vrcp.pop %v1667
      %v1696 = vmul.f32 1.0, %v1695
      %v1697 = vrcp.pop %v1668
      %v1698 = vmul.f32 1.0, %v1697
      %v1699 = vrcp.pop %v1669
      %v1700 = vmul.f32 1.0, %v1699
      %v1701 = vrcp.pop %v1670
      %v1702 = vmul.f32 1.0, %v1701
      %v1703 = vmul.f32 %v1545, %v1672
      %v1704 = vmul.f32 %v1548, %v1674
      %v1705 = vmul.f32 %v1553, %v1676
      %v1706 = vmul.f32 %v1556, %v1678
      %v1707 = vmul.f32 %v1561, %v1680
      %v1708 = vmul.f32 %v1564, %v1682
      %v1709 = vmul.f32 %v1569, %v1684
      %v1710 = vmul.f32 %v1572, %v1686
      %v1711 = vmul.f32 %v1577, %v1688
      %v1712 = vmul.f32 %v1580, %v1690
      %v1713 = vmul.f32 %v1585, %v1692
      %v1714 = vmul.f32 %v1588, %v1694
      %v1715 = vmul.f32 %v1593, %v1696
      %v1716 = vmul.f32 %v1596, %v1698
      %v1717 = vmul.f32 %v1601, %v1700
      %v1718 = vmul.f32 %v1604, %v1702
      %v1719 = vpack.c.bf16 %v1704, %v1703
      %v1720 = vpack.c.bf16 %v1706, %v1705
      %v1721 = vpack.c.bf16 %v1708, %v1707
      %v1722 = vpack.c.bf16 %v1710, %v1709
      %v1723 = vpack.c.bf16 %v1712, %v1711
      %v1724 = vpack.c.bf16 %v1714, %v1713
      %v1725 = vpack.c.bf16 %v1716, %v1715
      %v1726 = vpack.c.bf16 %v1718, %v1717
      %s1727 = scalar_lea.vmem %s2, 256
      %v1728 = vld [vmem:[%s1727] sm:$0xf]
      %v1729 = vld [vmem:[%s1727 + $0x4] sm:$0xf]
      %v1730 = vld [vmem:[%s1727 + $0x8] sm:$0xf]
      %v1731 = vld [vmem:[%s1727 + $0xc] sm:$0xf]
      %v1732 = vld [vmem:[%s1727 + $0x10] sm:$0xf]
      %v1733 = vld [vmem:[%s1727 + $0x14] sm:$0xf]
      %v1734 = vld [vmem:[%s1727 + $0x18] sm:$0xf]
      %v1735 = vld [vmem:[%s1727 + $0x1c] sm:$0xf]
      %v1736 = vld [vmem:[%s1727 + $0x20] sm:$0xf]
      %v1737 = vld [vmem:[%s1727 + $0x24] sm:$0xf]
      %v1738 = vld [vmem:[%s1727 + $0x28] sm:$0xf]
      %v1739 = vld [vmem:[%s1727 + $0x2c] sm:$0xf]
      %v1740 = vld [vmem:[%s1727 + $0x30] sm:$0xf]
      %v1741 = vld [vmem:[%s1727 + $0x34] sm:$0xf]
      %v1742 = vld [vmem:[%s1727 + $0x38] sm:$0xf]
      %v1743 = vld [vmem:[%s1727 + $0x3c] sm:$0xf]
      %s1744 = scalar_lea.vmem %s4, 5
      %v1745 = vld [vmem:[%s1744] sm:$0x1]
      %v1747 = vlaneseq
      %v1748 = vshrl.u32 %v1747, 7
      %v1749 = vsub.s32 0, %v1748
      %v1750 = vrot.slane %v1745, %v1749
      %v1768 = vunpack.c.l.b16 %v1728
      %v1769 = vunpack.c.l.b16 %v1729
      %v1770 = vunpack.c.l.b16 %v1730
      %v1771 = vunpack.c.l.b16 %v1731
      %v1772 = vunpack.c.l.b16 %v1732
      %v1773 = vunpack.c.l.b16 %v1733
      %v1774 = vunpack.c.l.b16 %v1734
      %v1775 = vunpack.c.l.b16 %v1735
      %v1776 = vunpack.c.l.b16 %v1736
      %v1777 = vunpack.c.l.b16 %v1737
      %v1778 = vunpack.c.l.b16 %v1738
      %v1779 = vunpack.c.l.b16 %v1739
      %v1780 = vunpack.c.l.b16 %v1740
      %v1781 = vunpack.c.l.b16 %v1741
      %v1782 = vunpack.c.l.b16 %v1742
      %v1783 = vunpack.c.l.b16 %v1743
      %v1784 = vpack.c.b16 %v1769, %v1768
      %v1785 = vpack.c.b16 %v1771, %v1770
      %v1786 = vpack.c.b16 %v1773, %v1772
      %v1787 = vpack.c.b16 %v1775, %v1774
      %v1788 = vpack.c.b16 %v1777, %v1776
      %v1789 = vpack.c.b16 %v1779, %v1778
      %v1790 = vpack.c.b16 %v1781, %v1780
      %v1791 = vpack.c.b16 %v1783, %v1782
      %1800 = vmatprep.subr.bf16.mxu0 0
      %1801 = vmatpush1.bf16.msra.mxu0 %v1784
      %1802 = vmatprep.subr.bf16.mxu0 0
      %1803 = vmatpush1.bf16.msra.mxu0 %v1785
      %1804 = vmatprep.subr.bf16.mxu0 0
      %1805 = vmatpush1.bf16.msra.mxu0 %v1786
      %1806 = vmatprep.subr.bf16.mxu0 0
      %1807 = vmatpush1.bf16.msra.mxu0 %v1787
      %1808 = vmatprep.subr.bf16.mxu0 0
      %1809 = vmatpush1.bf16.msra.mxu0 %v1788
      %1810 = vmatprep.subr.bf16.mxu0 0
      %1811 = vmatpush1.bf16.msra.mxu0 %v1789
      %1812 = vmatprep.subr.bf16.mxu0 0
      %1813 = vmatpush1.bf16.msra.mxu0 %v1790
      %1814 = vmatprep.subr.bf16.mxu0 0
      %1815 = vmatpush1.bf16.msra.mxu0 %v1791
      %1816 = vmatprep.subr.bf16.mxu0 0
      %1817 = vmatpush1.bf16.msra.mxu0 0
      %1818 = vmatprep.subr.bf16.mxu0 0
      %1819 = vmatpush1.bf16.msra.mxu0 0
      %1820 = vmatprep.subr.bf16.mxu0 0
      %1821 = vmatpush1.bf16.msra.mxu0 0
      %1822 = vmatprep.subr.bf16.mxu0 0
      %1823 = vmatpush1.bf16.msra.mxu0 0
      %1824 = vmatprep.subr.bf16.mxu0 0
      %1825 = vmatpush1.bf16.msra.mxu0 0
      %1826 = vmatprep.subr.bf16.mxu0 0
      %1827 = vmatpush1.bf16.msra.mxu0 0
      %1828 = vmatprep.subr.bf16.mxu0 0
      %1829 = vmatpush1.bf16.msra.mxu0 0
      %1830 = vmatprep.subr.bf16.mxu0 0
      %1831 = vmatpush1.bf16.msra.mxu0 0
      %1832 = vmatprep.mubr.bf16.mxu0 0
      %1833 = vmatmul.mubr.bf16.gmra.mrb[0].mxu0 %v1719
      %v1834 = vpop.f32.mrb[0].mxu0
      %v1835 = vadd.f32 %v1750, %v1834
      %v1836 = vpop.f32.mrb[0].mxu0
      %v1837 = vpop.f32.mrb[0].mxu0
      %v1838 = vadd.f32 %v1750, %v1837
      %v1839 = vpop.f32.mrb[0].mxu0
      %1840 = vmatprep.mubr.bf16.mxu0 0
      %1841 = vmatmul.mubr.bf16.gmra.mrb[0].mxu0 %v1720
      %v1842 = vpop.f32.mrb[0].mxu0
      %v1843 = vadd.f32 %v1750, %v1842
      %v1844 = vpop.f32.mrb[0].mxu0
      %v1845 = vpop.f32.mrb[0].mxu0
      %v1846 = vadd.f32 %v1750, %v1845
      %v1847 = vpop.f32.mrb[0].mxu0
      %1848 = vmatprep.mubr.bf16.mxu0 0
      %1849 = vmatmul.mubr.bf16.gmra.mrb[0].mxu0 %v1721
      %v1850 = vpop.f32.mrb[0].mxu0
      %v1851 = vadd.f32 %v1750, %v1850
      %v1852 = vpop.f32.mrb[0].mxu0
      %v1853 = vpop.f32.mrb[0].mxu0
      %v1854 = vadd.f32 %v1750, %v1853
      %v1855 = vpop.f32.mrb[0].mxu0
      %1856 = vmatprep.mubr.bf16.mxu0 0
      %1857 = vmatmul.mubr.bf16.gmra.mrb[0].mxu0 %v1722
      %v1858 = vpop.f32.mrb[0].mxu0
      %v1859 = vadd.f32 %v1750, %v1858
      %v1860 = vpop.f32.mrb[0].mxu0
      %v1861 = vpop.f32.mrb[0].mxu0
      %v1862 = vadd.f32 %v1750, %v1861
      %v1863 = vpop.f32.mrb[0].mxu0
      %1864 = vmatprep.mubr.bf16.mxu0 0
      %1865 = vmatmul.mubr.bf16.gmra.mrb[0].mxu0 %v1723
      %v1866 = vpop.f32.mrb[0].mxu0
      %v1867 = vadd.f32 %v1750, %v1866
      %v1868 = vpop.f32.mrb[0].mxu0
      %v1869 = vpop.f32.mrb[0].mxu0
      %v1870 = vadd.f32 %v1750, %v1869
      %v1871 = vpop.f32.mrb[0].mxu0
      %1872 = vmatprep.mubr.bf16.mxu0 0
      %1873 = vmatmul.mubr.bf16.gmra.mrb[0].mxu0 %v1724
      %v1874 = vpop.f32.mrb[0].mxu0
      %v1875 = vadd.f32 %v1750, %v1874
      %v1876 = vpop.f32.mrb[0].mxu0
      %v1877 = vpop.f32.mrb[0].mxu0
      %v1878 = vadd.f32 %v1750, %v1877
      %v1879 = vpop.f32.mrb[0].mxu0
      %1880 = vmatprep.mubr.bf16.mxu0 0
      %1881 = vmatmul.mubr.bf16.gmra.mrb[0].mxu0 %v1725
      %v1882 = vpop.f32.mrb[0].mxu0
      %v1883 = vadd.f32 %v1750, %v1882
      %v1884 = vpop.f32.mrb[0].mxu0
      %v1885 = vpop.f32.mrb[0].mxu0
      %v1886 = vadd.f32 %v1750, %v1885
      %v1887 = vpop.f32.mrb[0].mxu0
      %1888 = vmatprep.mubr.bf16.mxu0 0
      %1889 = vmatmul.mubr.bf16.gmra.mrb[0].mxu0 %v1726
      %v1890 = vpop.f32.mrb[0].mxu0
      %v1891 = vadd.f32 %v1750, %v1890
      %v1892 = vpop.f32.mrb[0].mxu0
      %v1893 = vpop.f32.mrb[0].mxu0
      %v1894 = vadd.f32 %v1750, %v1893
      %v1895 = vpop.f32.mrb[0].mxu0
      %1896 = vdwg.mxu0
      %v1897 = vxor.u32 %v1835, 2147483648
      %v1898 = vxor.u32 %v1838, 2147483648
      %v1899 = vxor.u32 %v1843, 2147483648
      %v1900 = vxor.u32 %v1846, 2147483648
      %v1901 = vxor.u32 %v1851, 2147483648
      %v1902 = vxor.u32 %v1854, 2147483648
      %v1903 = vxor.u32 %v1859, 2147483648
      %v1904 = vxor.u32 %v1862, 2147483648
      %v1905 = vxor.u32 %v1867, 2147483648
      %v1906 = vxor.u32 %v1870, 2147483648
      %v1907 = vxor.u32 %v1875, 2147483648
      %v1908 = vxor.u32 %v1878, 2147483648
      %v1909 = vxor.u32 %v1883, 2147483648
      %v1910 = vxor.u32 %v1886, 2147483648
      %v1911 = vxor.u32 %v1891, 2147483648
      %v1912 = vxor.u32 %v1894, 2147483648
      %v1913 = vmul.f32 %v1897, 1.442695
      %v1914 = vpow.pop %v1913
      %v1915 = vmul.f32 %v1898, 1.442695
      %v1916 = vpow.pop %v1915
      %v1917 = vmul.f32 %v1899, 1.442695
      %v1918 = vpow.pop %v1917
      %v1919 = vmul.f32 %v1900, 1.442695
      %v1920 = vpow.pop %v1919
      %v1921 = vmul.f32 %v1901, 1.442695
      %v1922 = vpow.pop %v1921
      %v1923 = vmul.f32 %v1902, 1.442695
      %v1924 = vpow.pop %v1923
      %v1925 = vmul.f32 %v1903, 1.442695
      %v1926 = vpow.pop %v1925
      %v1927 = vmul.f32 %v1904, 1.442695
      %v1928 = vpow.pop %v1927
      %v1929 = vmul.f32 %v1905, 1.442695
      %v1930 = vpow.pop %v1929
      %v1931 = vmul.f32 %v1906, 1.442695
      %v1932 = vpow.pop %v1931
      %v1933 = vmul.f32 %v1907, 1.442695
      %v1934 = vpow.pop %v1933
      %v1935 = vmul.f32 %v1908, 1.442695
      %v1936 = vpow.pop %v1935
      %v1937 = vmul.f32 %v1909, 1.442695
      %v1938 = vpow.pop %v1937
      %v1939 = vmul.f32 %v1910, 1.442695
      %v1940 = vpow.pop %v1939
      %v1941 = vmul.f32 %v1911, 1.442695
      %v1942 = vpow.pop %v1941
      %v1943 = vmul.f32 %v1912, 1.442695
      %v1944 = vpow.pop %v1943
      %v1945 = vadd.f32 %v1914, 1.0
      %v1946 = vadd.f32 %v1916, 1.0
      %v1947 = vadd.f32 %v1918, 1.0
      %v1948 = vadd.f32 %v1920, 1.0
      %v1949 = vadd.f32 %v1922, 1.0
      %v1950 = vadd.f32 %v1924, 1.0
      %v1951 = vadd.f32 %v1926, 1.0
      %v1952 = vadd.f32 %v1928, 1.0
      %v1953 = vadd.f32 %v1930, 1.0
      %v1954 = vadd.f32 %v1932, 1.0
      %v1955 = vadd.f32 %v1934, 1.0
      %v1956 = vadd.f32 %v1936, 1.0
      %v1957 = vadd.f32 %v1938, 1.0
      %v1958 = vadd.f32 %v1940, 1.0
      %v1959 = vadd.f32 %v1942, 1.0
      %v1960 = vadd.f32 %v1944, 1.0
      %v1961 = vrcp.pop %v1945
      %v1962 = vmul.f32 1.0, %v1961
      %v1963 = vrcp.pop %v1946
      %v1964 = vmul.f32 1.0, %v1963
      %v1965 = vrcp.pop %v1947
      %v1966 = vmul.f32 1.0, %v1965
      %v1967 = vrcp.pop %v1948
      %v1968 = vmul.f32 1.0, %v1967
      %v1969 = vrcp.pop %v1949
      %v1970 = vmul.f32 1.0, %v1969
      %v1971 = vrcp.pop %v1950
      %v1972 = vmul.f32 1.0, %v1971
      %v1973 = vrcp.pop %v1951
      %v1974 = vmul.f32 1.0, %v1973
      %v1975 = vrcp.pop %v1952
      %v1976 = vmul.f32 1.0, %v1975
      %v1977 = vrcp.pop %v1953
      %v1978 = vmul.f32 1.0, %v1977
      %v1979 = vrcp.pop %v1954
      %v1980 = vmul.f32 1.0, %v1979
      %v1981 = vrcp.pop %v1955
      %v1982 = vmul.f32 1.0, %v1981
      %v1983 = vrcp.pop %v1956
      %v1984 = vmul.f32 1.0, %v1983
      %v1985 = vrcp.pop %v1957
      %v1986 = vmul.f32 1.0, %v1985
      %v1987 = vrcp.pop %v1958
      %v1988 = vmul.f32 1.0, %v1987
      %v1989 = vrcp.pop %v1959
      %v1990 = vmul.f32 1.0, %v1989
      %v1991 = vrcp.pop %v1960
      %v1992 = vmul.f32 1.0, %v1991
      %v1993 = vmul.f32 %v1835, %v1962
      %v1994 = vmul.f32 %v1838, %v1964
      %v1995 = vmul.f32 %v1843, %v1966
      %v1996 = vmul.f32 %v1846, %v1968
      %v1997 = vmul.f32 %v1851, %v1970
      %v1998 = vmul.f32 %v1854, %v1972
      %v1999 = vmul.f32 %v1859, %v1974
      %v2000 = vmul.f32 %v1862, %v1976
      %v2001 = vmul.f32 %v1867, %v1978
      %v2002 = vmul.f32 %v1870, %v1980
      %v2003 = vmul.f32 %v1875, %v1982
      %v2004 = vmul.f32 %v1878, %v1984
      %v2005 = vmul.f32 %v1883, %v1986
      %v2006 = vmul.f32 %v1886, %v1988
      %v2007 = vmul.f32 %v1891, %v1990
      %v2008 = vmul.f32 %v1894, %v1992
      %v2009 = vpack.c.bf16 %v1994, %v1993
      %v2010 = vpack.c.bf16 %v1996, %v1995
      %v2011 = vpack.c.bf16 %v1998, %v1997
      %v2012 = vpack.c.bf16 %v2000, %v1999
      %v2013 = vpack.c.bf16 %v2002, %v2001
      %v2014 = vpack.c.bf16 %v2004, %v2003
      %v2015 = vpack.c.bf16 %v2006, %v2005
      %v2016 = vpack.c.bf16 %v2008, %v2007
      %v2017 = vld [vmem:[%s3] sm:$0xf]
      %v2018 = vld [vmem:[%s3 + $0x4] sm:$0xf]
      %v2019 = vld [vmem:[%s3 + $0x8] sm:$0xf]
      %v2020 = vld [vmem:[%s3 + $0xc] sm:$0xf]
      %v2021 = vld [vmem:[%s3 + $0x10] sm:$0xf]
      %v2022 = vld [vmem:[%s3 + $0x14] sm:$0xf]
      %v2023 = vld [vmem:[%s3 + $0x18] sm:$0xf]
      %v2024 = vld [vmem:[%s3 + $0x1c] sm:$0xf]
      %v2025 = vld [vmem:[%s3 + $0x20] sm:$0xf]
      %v2026 = vld [vmem:[%s3 + $0x24] sm:$0xf]
      %v2027 = vld [vmem:[%s3 + $0x28] sm:$0xf]
      %v2028 = vld [vmem:[%s3 + $0x2c] sm:$0xf]
      %v2029 = vld [vmem:[%s3 + $0x30] sm:$0xf]
      %v2030 = vld [vmem:[%s3 + $0x34] sm:$0xf]
      %v2031 = vld [vmem:[%s3 + $0x38] sm:$0xf]
      %v2032 = vld [vmem:[%s3 + $0x3c] sm:$0xf]
      %v2033 = vld [vmem:[%s5] sm:$0x1]
      %v2035 = vlaneseq
      %v2036 = vshrl.u32 %v2035, 7
      %v2037 = vsub.s32 0, %v2036
      %v2038 = vrot.slane %v2033, %v2037
      %v2056 = vunpack.c.l.b16 %v2017
      %v2057 = vunpack.c.l.b16 %v2018
      %v2058 = vunpack.c.l.b16 %v2019
      %v2059 = vunpack.c.l.b16 %v2020
      %v2060 = vunpack.c.l.b16 %v2021
      %v2061 = vunpack.c.l.b16 %v2022
      %v2062 = vunpack.c.l.b16 %v2023
      %v2063 = vunpack.c.l.b16 %v2024
      %v2064 = vunpack.c.l.b16 %v2025
      %v2065 = vunpack.c.l.b16 %v2026
      %v2066 = vunpack.c.l.b16 %v2027
      %v2067 = vunpack.c.l.b16 %v2028
      %v2068 = vunpack.c.l.b16 %v2029
      %v2069 = vunpack.c.l.b16 %v2030
      %v2070 = vunpack.c.l.b16 %v2031
      %v2071 = vunpack.c.l.b16 %v2032
      %v2072 = vpack.c.b16 %v2057, %v2056
      %v2073 = vpack.c.b16 %v2059, %v2058
      %v2074 = vpack.c.b16 %v2061, %v2060
      %v2075 = vpack.c.b16 %v2063, %v2062
      %v2076 = vpack.c.b16 %v2065, %v2064
      %v2077 = vpack.c.b16 %v2067, %v2066
      %v2078 = vpack.c.b16 %v2069, %v2068
      %v2079 = vpack.c.b16 %v2071, %v2070
      %2088 = vmatprep.subr.bf16.mxu0 0
      %2089 = vmatpush1.bf16.msra.mxu0 %v2072
      %2090 = vmatprep.subr.bf16.mxu0 0
      %2091 = vmatpush1.bf16.msra.mxu0 %v2073
      %2092 = vmatprep.subr.bf16.mxu0 0
      %2093 = vmatpush1.bf16.msra.mxu0 %v2074
      %2094 = vmatprep.subr.bf16.mxu0 0
      %2095 = vmatpush1.bf16.msra.mxu0 %v2075
      %2096 = vmatprep.subr.bf16.mxu0 0
      %2097 = vmatpush1.bf16.msra.mxu0 %v2076
      %2098 = vmatprep.subr.bf16.mxu0 0
      %2099 = vmatpush1.bf16.msra.mxu0 %v2077
      %2100 = vmatprep.subr.bf16.mxu0 0
      %2101 = vmatpush1.bf16.msra.mxu0 %v2078
      %2102 = vmatprep.subr.bf16.mxu0 0
      %2103 = vmatpush1.bf16.msra.mxu0 %v2079
      %2104 = vmatprep.subr.bf16.mxu0 0
      %2105 = vmatpush1.bf16.msra.mxu0 0
      %2106 = vmatprep.subr.bf16.mxu0 0
      %2107 = vmatpush1.bf16.msra.mxu0 0
      %2108 = vmatprep.subr.bf16.mxu0 0
      %2109 = vmatpush1.bf16.msra.mxu0 0
      %2110 = vmatprep.subr.bf16.mxu0 0
      %2111 = vmatpush1.bf16.msra.mxu0 0
      %2112 = vmatprep.subr.bf16.mxu0 0
      %2113 = vmatpush1.bf16.msra.mxu0 0
      %2114 = vmatprep.subr.bf16.mxu0 0
      %2115 = vmatpush1.bf16.msra.mxu0 0
      %2116 = vmatprep.subr.bf16.mxu0 0
      %2117 = vmatpush1.bf16.msra.mxu0 0
      %2118 = vmatprep.subr.bf16.mxu0 0
      %2119 = vmatpush1.bf16.msra.mxu0 0
      %2120 = vmatprep.mubr.bf16.mxu0 0
      %2121 = vmatmul.mubr.bf16.gmra.mrb[0].mxu0 %v2009
      %v2122 = vpop.f32.mrb[0].mxu0
      %v2123 = vadd.f32 %v2038, %v2122
      %v2124 = vpop.f32.mrb[0].mxu0
      %v2125 = vpop.f32.mrb[0].mxu0
      %v2126 = vadd.f32 %v2038, %v2125
      %v2127 = vpop.f32.mrb[0].mxu0
      %2128 = vmatprep.mubr.bf16.mxu0 0
      %2129 = vmatmul.mubr.bf16.gmra.mrb[0].mxu0 %v2010
      %v2130 = vpop.f32.mrb[0].mxu0
      %v2131 = vadd.f32 %v2038, %v2130
      %v2132 = vpop.f32.mrb[0].mxu0
      %v2133 = vpop.f32.mrb[0].mxu0
      %v2134 = vadd.f32 %v2038, %v2133
      %v2135 = vpop.f32.mrb[0].mxu0
      %2136 = vmatprep.mubr.bf16.mxu0 0
      %2137 = vmatmul.mubr.bf16.gmra.mrb[0].mxu0 %v2011
      %v2138 = vpop.f32.mrb[0].mxu0
      %v2139 = vadd.f32 %v2038, %v2138
      %v2140 = vpop.f32.mrb[0].mxu0
      %v2141 = vpop.f32.mrb[0].mxu0
      %v2142 = vadd.f32 %v2038, %v2141
      %v2143 = vpop.f32.mrb[0].mxu0
      %2144 = vmatprep.mubr.bf16.mxu0 0
      %2145 = vmatmul.mubr.bf16.gmra.mrb[0].mxu0 %v2012
      %v2146 = vpop.f32.mrb[0].mxu0
      %v2147 = vadd.f32 %v2038, %v2146
      %v2148 = vpop.f32.mrb[0].mxu0
      %v2149 = vpop.f32.mrb[0].mxu0
      %v2150 = vadd.f32 %v2038, %v2149
      %v2151 = vpop.f32.mrb[0].mxu0
      %2152 = vmatprep.mubr.bf16.mxu0 0
      %2153 = vmatmul.mubr.bf16.gmra.mrb[0].mxu0 %v2013
      %v2154 = vpop.f32.mrb[0].mxu0
      %v2155 = vadd.f32 %v2038, %v2154
      %v2156 = vpop.f32.mrb[0].mxu0
      %v2157 = vpop.f32.mrb[0].mxu0
      %v2158 = vadd.f32 %v2038, %v2157
      %v2159 = vpop.f32.mrb[0].mxu0
      %2160 = vmatprep.mubr.bf16.mxu0 0
      %2161 = vmatmul.mubr.bf16.gmra.mrb[0].mxu0 %v2014
      %v2162 = vpop.f32.mrb[0].mxu0
      %v2163 = vadd.f32 %v2038, %v2162
      %v2164 = vpop.f32.mrb[0].mxu0
      %v2165 = vpop.f32.mrb[0].mxu0
      %v2166 = vadd.f32 %v2038, %v2165
      %v2167 = vpop.f32.mrb[0].mxu0
      %2168 = vmatprep.mubr.bf16.mxu0 0
      %2169 = vmatmul.mubr.bf16.gmra.mrb[0].mxu0 %v2015
      %v2170 = vpop.f32.mrb[0].mxu0
      %v2171 = vadd.f32 %v2038, %v2170
      %v2172 = vpop.f32.mrb[0].mxu0
      %v2173 = vpop.f32.mrb[0].mxu0
      %v2174 = vadd.f32 %v2038, %v2173
      %v2175 = vpop.f32.mrb[0].mxu0
      %2176 = vmatprep.mubr.bf16.mxu0 0
      %2177 = vmatmul.mubr.bf16.gmra.mrb[0].mxu0 %v2016
      %v2178 = vpop.f32.mrb[0].mxu0
      %v2179 = vadd.f32 %v2038, %v2178
      %v2180 = vpop.f32.mrb[0].mxu0
      %v2181 = vpop.f32.mrb[0].mxu0
      %v2182 = vadd.f32 %v2038, %v2181
      %v2183 = vpop.f32.mrb[0].mxu0
      %2184 = vdwg.mxu0
      %2185 = vst [vmem:[%s253] sm:$0xff] %v2123
      %2186 = vst [vmem:[%s253 + $0x8] sm:$0xff] %v2126
      %2187 = vst [vmem:[%s253 + $0x10] sm:$0xff] %v2131
      %2188 = vst [vmem:[%s253 + $0x18] sm:$0xff] %v2134
      %2189 = vst [vmem:[%s253 + $0x20] sm:$0xff] %v2139
      %2190 = vst [vmem:[%s253 + $0x28] sm:$0xff] %v2142
      %2191 = vst [vmem:[%s253 + $0x30] sm:$0xff] %v2147
      %2192 = vst [vmem:[%s253 + $0x38] sm:$0xff] %v2150
      %2193 = vst [vmem:[%s253 + $0x40] sm:$0xff] %v2155
      %2194 = vst [vmem:[%s253 + $0x48] sm:$0xff] %v2158
      %2195 = vst [vmem:[%s253 + $0x50] sm:$0xff] %v2163
      %2196 = vst [vmem:[%s253 + $0x58] sm:$0xff] %v2166
      %2197 = vst [vmem:[%s253 + $0x60] sm:$0xff] %v2171
      %2198 = vst [vmem:[%s253 + $0x68] sm:$0xff] %v2174
      %2199 = vst [vmem:[%s253 + $0x70] sm:$0xff] %v2179
      %2200 = vst [vmem:[%s253 + $0x78] sm:$0xff] %v2182
      %s2201 = smul.u32 16, %s17
      %p2202 = scmp.lt.s32.totalorder %s2201, 31
      %s2203 = scalar_select %p2202, %s2201, 31
      %s2204 = smul.addr %s2203, 8
      %s2205 = scalar_lea.vmem %s6, %s2204
      // Predicated region
      $region45: #{mlp_forward.1} parent=43 // pred_check
        %p2206 = pneg %p166
      $region46: #{mlp_forward.1} parent=43 // pred_check_branch
        %2208 = sbr.rel (%p2206) target = $region48
      $region47: #{mlp_forward.1} parent=43 // pred_region
        %s2209 = smul.u32 16, %s17
      $region48: #{mlp_forward.1} parent=43 // pred_fallthru
        _
    $region44: #{mlp_forward.1} parent=5 // pred_fallthru
      _
    %p2210 = scmp.le.s32.totalorder 2, %s12
    // Predicated region
    $region49: #{mlp_forward.1} parent=5 // pred_check
      %p2211 = pneg %p2210
    $region50: #{mlp_forward.1} parent=5 // pred_check_branch
      %2213 = sbr.rel (%p2211) target = $region52
    $region51: #{mlp_forward.1} parent=5 // pred_region
      %s2214 = ssub.s32 %s12, 2
      // Predicated region
      $region53: #{mlp_forward.1} parent=51 // pred_check
        %p2215 = pneg %p172
      $region54: #{mlp_forward.1} parent=51 // pred_check_branch
        %2217 = sbr.rel (%p2215) target = $region56
      $region55: #{mlp_forward.1} parent=51 // pred_region
        %s2218 = smul.u32 16, %s18
        %p2219 = scmp.lt.s32.totalorder %s2218, 31
        %s2220 = scalar_select %p2219, %s2218, 31
        %s2221 = smul.addr %s2220, 8
        %s2222 = scalar_lea.vmem %s6, %s2221
      $region56: #{mlp_forward.1} parent=51 // pred_fallthru
        _
    $region52: #{mlp_forward.1} parent=5 // pred_fallthru
      _
  $region6: #{mlp_forward.1} parent=0 // loop_footer
    %s16 = sadd.s32 1, %s12
  $region7: #{mlp_forward.1} parent=0 // loop_footer_branch
    %11 = sbr.rel target = $region3
  $region8: #{mlp_forward.1} parent=0 // loop_exit
    _

</llo_original>
